<compile_context>
chip_gen: v7x
topology: tpu7x:2x2x1
jax: 0.10.0
libtpu: 0.0.40
codegen_flags: <defaults>
</compile_context>

<pallas_src>
import functools

import jax
import jax.numpy as jnp
from jax.experimental import pallas as pl
from jax.experimental.pallas import tpu as pltpu


def _layer_norm(x, gamma, eps=1e-5):
    # x: (T, F) f32, gamma: (1, F) f32; beta is zeros (registered buffer).
    mu = jnp.mean(x, axis=-1, keepdims=True)
    var = jnp.mean((x - mu) ** 2, axis=-1, keepdims=True)
    return (x - mu) * jax.lax.rsqrt(var + eps) * gamma


def cross_attention_kernel(x_ref, ctx_ref, gx_ref, gc_ref,
                           wq_ref, wk_ref, wv_ref, wo_ref,
                           w1x_ref, w1g_ref, w2_ref,
                           o_ref, *, heads, dim_head):
    f32 = jnp.float32
    bf16 = jnp.bfloat16

    x = x_ref[0]          # (TN, D) f32
    ctx = ctx_ref[0]      # (M, C)  f32

    # --- LayerNorms in f32 (gamma learned, beta = 0) ---
    xn = _layer_norm(x, gx_ref[...])
    cn = _layer_norm(ctx, gc_ref[...])
    xn_b = xn.astype(bf16)
    cn_b = cn.astype(bf16)

    # --- q projection, batched over heads (scale pre-folded into wq) ---
    xn_h = jnp.broadcast_to(xn_b[None], (heads,) + xn_b.shape)       # (H, TN, D)
    q = jnp.einsum("htd,hdf->htf", xn_h, wq_ref[...],
                   preferred_element_type=f32)                        # (H, TN, dh)

    # --- k / v projections (shared across heads) ---
    k = jnp.dot(cn_b, wk_ref[...], preferred_element_type=f32)        # (M, dh)
    v = jnp.dot(cn_b, wv_ref[...], preferred_element_type=f32)        # (M, dh)
    k_h = jnp.broadcast_to(k.astype(bf16)[None], (heads,) + k.shape)  # (H, M, dh)
    v_h = jnp.broadcast_to(v.astype(bf16)[None], (heads,) + v.shape)  # (H, M, dh)

    # --- attention scores + softmax (f32 math, EUP reciprocal) ---
    sim = jnp.einsum("hqd,hkd->hqk", q.astype(bf16), k_h,
                     preferred_element_type=f32)                      # (H, TN, M)
    sim = sim - jnp.max(sim, axis=-1, keepdims=True)
    e = jnp.exp(sim)
    denom = jnp.sum(e, axis=-1, keepdims=True)
    p = e * pl.reciprocal(denom, approx=True)

    # --- attend + output projection (per-head dot, summed over heads) ---
    attn_out = jnp.einsum("hqk,hkd->hqd", p.astype(bf16), v_h,
                          preferred_element_type=f32)                 # (H, TN, dh)
    out_h = jnp.einsum("hqd,hdf->hqf", attn_out.astype(bf16), wo_ref[...],
                       preferred_element_type=f32)                    # (H, TN, D)
    out = jnp.sum(out_h, axis=0)                                      # (TN, D)

    # --- parallel SwiGLU feed-forward on the normed input ---
    ff_x = jnp.dot(xn_b, w1x_ref[...], preferred_element_type=f32)    # (TN, ffi)
    ff_g = jnp.dot(xn_b, w1g_ref[...], preferred_element_type=f32)    # (TN, ffi)
    ff_act = (jax.nn.silu(ff_g) * ff_x).astype(bf16)
    ff_out = jnp.dot(ff_act, w2_ref[...], preferred_element_type=f32)  # (TN, D)

    o_ref[0] = (out + ff_out).astype(o_ref.dtype)


def prepare_params(params, *, heads, dim_head):
    """One-time preprocessing: split fused weights, fold scale, cast to bf16."""
    D = params["wqT"].shape[0]
    ffi = params["w2T"].shape[0]
    scale = dim_head ** -0.5
    bf16 = jnp.bfloat16

    wq3 = (params["wqT"] * scale).reshape(D, heads, dim_head).transpose(1, 0, 2)
    wout3 = params["woutT"].reshape(heads, dim_head, D)
    return {
        "gamma_x": params["gamma_x"],
        "gamma_c": params["gamma_c"],
        "wq3": wq3.astype(bf16),                                   # (H, D, dh)
        "wkT": params["wkvT"][:, :dim_head].astype(bf16),          # (C, dh)
        "wvT": params["wkvT"][:, dim_head:].astype(bf16),          # (C, dh)
        "wout3": wout3.astype(bf16),                               # (H, dh, D)
        "w1xT": params["w1T"][:, :ffi].astype(bf16),               # (D, ffi)
        "w1gT": params["w1T"][:, ffi:].astype(bf16),               # (D, ffi)
        "w2T": params["w2T"].astype(bf16),                         # (ffi, D)
    }


def cross_attention(x, context, kp, *, heads, dim_head, tile_n=8):
    B, N, D = x.shape
    _, M, C = context.shape
    ffi = kp["w2T"].shape[0]
    assert N % tile_n == 0

    kernel = functools.partial(cross_attention_kernel,
                               heads=heads, dim_head=dim_head)

    return pl.pallas_call(
        kernel,
        out_shape=jax.ShapeDtypeStruct((B, N, D), jnp.float32),
        grid_spec=pltpu.PrefetchScalarGridSpec(
            num_scalar_prefetch=0,
            grid=(B, N // tile_n),
            in_specs=[
                pl.BlockSpec((1, tile_n, D), lambda b, n: (b, n, 0)),        # x
                pl.BlockSpec((1, M, C), lambda b, n: (b, 0, 0)),             # context
                pl.BlockSpec((1, D), lambda b, n: (0, 0)),                   # gamma_x
                pl.BlockSpec((1, C), lambda b, n: (0, 0)),                   # gamma_c
                pl.BlockSpec((heads, D, dim_head), lambda b, n: (0, 0, 0)),  # wq3
                pl.BlockSpec((C, dim_head), lambda b, n: (0, 0)),            # wkT
                pl.BlockSpec((C, dim_head), lambda b, n: (0, 0)),            # wvT
                pl.BlockSpec((heads, dim_head, D), lambda b, n: (0, 0, 0)),  # wout3
                pl.BlockSpec((D, ffi), lambda b, n: (0, 0)),                 # w1xT
                pl.BlockSpec((D, ffi), lambda b, n: (0, 0)),                 # w1gT
                pl.BlockSpec((ffi, D), lambda b, n: (0, 0)),                 # w2T
            ],
            out_specs=pl.BlockSpec((1, tile_n, D), lambda b, n: (b, n, 0)),
        ),
        compiler_params=pltpu.CompilerParams(
            dimension_semantics=("parallel", "parallel"),
            vmem_limit_bytes=48 * 1024 * 1024,
        ),
    )(x, context, kp["gamma_x"], kp["gamma_c"],
      kp["wq3"], kp["wkT"], kp["wvT"], kp["wout3"],
      kp["w1xT"], kp["w1gT"], kp["w2T"])


def reference(x, context, params, *, heads, dim_head):
    # Pure-JAX f32 reference mirroring the PyTorch forward.
    def ln(t, g):
        mu = jnp.mean(t, -1, keepdims=True)
        var = jnp.mean((t - mu) ** 2, -1, keepdims=True)
        return (t - mu) * jax.lax.rsqrt(var + 1e-5) * g
    xn = ln(x, params["gamma_x"][0])
    cn = ln(context, params["gamma_c"][0])
    q = xn @ params["wqT"]
    B, N, _ = q.shape
    q = q.reshape(B, N, heads, dim_head).transpose(0, 2, 1, 3) * dim_head ** -0.5
    kv = cn @ params["wkvT"]
    k, v = kv[..., :dim_head], kv[..., dim_head:]
    sim = jnp.einsum("bhid,bjd->bhij", q, k)
    sim = sim - jnp.max(sim, -1, keepdims=True)
    attn = jax.nn.softmax(sim, -1)
    out = jnp.einsum("bhij,bjd->bhid", attn, v)
    out = out.transpose(0, 2, 1, 3).reshape(B, N, heads * dim_head)
    out = out @ params["woutT"]
    ff = xn @ params["w1T"]
    ffi = params["w2T"].shape[0]
    ff = jax.nn.silu(ff[..., ffi:]) * ff[..., :ffi]
    return out + ff @ params["w2T"]


if __name__ == "__main__":
    # Lane-aligned small shapes (D, C, dim_head, ffi multiples of 128; N, M
    # multiples of 8) so all loads/stores are unmasked and vregs stay dense.
    B, N, M = 2, 16, 16
    D, C = 128, 128
    heads, dim_head, ff_mult = 2, 128, 4
    inner = heads * dim_head
    ffi = ff_mult * D

    key = jax.random.PRNGKey(0)
    ks = jax.random.split(key, 8)
    x = jax.random.normal(ks[0], (B, N, D), jnp.float32)
    context = jax.random.normal(ks[1], (B, M, C), jnp.float32)

    # PyTorch Linear weight is (out, in); we store transposed (in, out) f32
    # masters and derive the bf16 kernel params once.
    params = {
        "gamma_x": jnp.ones((1, D), jnp.float32),
        "gamma_c": jnp.ones((1, C), jnp.float32),
        "wqT":   0.05 * jax.random.normal(ks[2], (D, inner), jnp.float32),
        "wkvT":  0.05 * jax.random.normal(ks[3], (C, 2 * dim_head), jnp.float32),
        "woutT": 0.05 * jax.random.normal(ks[4], (inner, D), jnp.float32),
        "w1T":   0.05 * jax.random.normal(ks[5], (D, 2 * ffi), jnp.float32),
        "w2T":   0.05 * jax.random.normal(ks[6], (ffi, D), jnp.float32),
    }
    kparams = prepare_params(params, heads=heads, dim_head=dim_head)

    out = cross_attention(x, context, kparams, heads=heads, dim_head=dim_head)
    out = jax.block_until_ready(out)

    ref = reference(x, context, params, heads=heads, dim_head=dim_head)
    assert out.shape == (B, N, D)
    # bf16 matmul operands + approx reciprocal -> relaxed tolerance vs f32 ref.
    assert jnp.allclose(out, ref, atol=2e-2, rtol=2e-2), "mismatch vs reference"
    print("KERNEL_OK")
</pallas_src>

<mosaic_0001>
module attributes {stable_mosaic.version = 11 : i64} {
  func.func @cross_attention_kernel(%arg0: i32, %arg1: i32, %arg2: memref<1x8x128xf32, #tpu.memory_space<vmem>>, %arg3: memref<1x16x128xf32, #tpu.memory_space<vmem>>, %arg4: memref<1x128xf32, #tpu.memory_space<vmem>>, %arg5: memref<1x128xf32, #tpu.memory_space<vmem>>, %arg6: memref<2x128x128xbf16, #tpu.memory_space<vmem>>, %arg7: memref<128x128xbf16, #tpu.memory_space<vmem>>, %arg8: memref<128x128xbf16, #tpu.memory_space<vmem>>, %arg9: memref<2x128x128xbf16, #tpu.memory_space<vmem>>, %arg10: memref<128x512xbf16, #tpu.memory_space<vmem>>, %arg11: memref<128x512xbf16, #tpu.memory_space<vmem>>, %arg12: memref<512x128xbf16, #tpu.memory_space<vmem>>, %arg13: memref<1x8x128xf32, #tpu.memory_space<vmem>>) attributes {dimension_semantics = [#tpu.dimension_semantics<parallel>, #tpu.dimension_semantics<parallel>], iteration_bounds = array<i64: 2, 2>, scalar_prefetch = 0 : i64, scratch_operands = 0 : i64, tpu.core_type = #tpu.core_type<tc>, window_params = [{transform_indices = @transform_0, window_bounds = array<i64: 1, 8, 128>}, {transform_indices = @transform_1, window_bounds = array<i64: 1, 16, 128>}, {pipeline_mode = #tpu.pipeline_mode<synchronous>, transform_indices = @transform_2, window_bounds = array<i64: 1, 128>}, {pipeline_mode = #tpu.pipeline_mode<synchronous>, transform_indices = @transform_3, window_bounds = array<i64: 1, 128>}, {pipeline_mode = #tpu.pipeline_mode<synchronous>, transform_indices = @transform_4, window_bounds = array<i64: 2, 128, 128>}, {pipeline_mode = #tpu.pipeline_mode<synchronous>, transform_indices = @transform_5, window_bounds = array<i64: 128, 128>}, {pipeline_mode = #tpu.pipeline_mode<synchronous>, transform_indices = @transform_6, window_bounds = array<i64: 128, 128>}, {pipeline_mode = #tpu.pipeline_mode<synchronous>, transform_indices = @transform_7, window_bounds = array<i64: 2, 128, 128>}, {pipeline_mode = #tpu.pipeline_mode<synchronous>, transform_indices = @transform_8, window_bounds = array<i64: 128, 512>}, {pipeline_mode = #tpu.pipeline_mode<synchronous>, transform_indices = @transform_9, window_bounds = array<i64: 128, 512>}, {pipeline_mode = #tpu.pipeline_mode<synchronous>, transform_indices = @transform_10, window_bounds = array<i64: 512, 128>}, {transform_indices = @transform_11, window_bounds = array<i64: 1, 8, 128>}]} {
    %c0 = arith.constant 0 : index
    %c0_0 = arith.constant 0 : index
    %c0_1 = arith.constant 0 : index
    %0 = vector.load %arg2[%c0, %c0_0, %c0_1] : memref<1x8x128xf32, #tpu.memory_space<vmem>>, vector<1x8x128xf32>
    %1 = vector.shape_cast %0 : vector<1x8x128xf32> to vector<8x128xf32>
    %c0_2 = arith.constant 0 : index
    %c0_3 = arith.constant 0 : index
    %c0_4 = arith.constant 0 : index
    %2 = vector.load %arg3[%c0_2, %c0_3, %c0_4] : memref<1x16x128xf32, #tpu.memory_space<vmem>>, vector<1x16x128xf32>
    %3 = vector.shape_cast %2 : vector<1x16x128xf32> to vector<16x128xf32>
    %c0_5 = arith.constant 0 : index
    %c0_6 = arith.constant 0 : index
    %4 = vector.load %arg4[%c0_5, %c0_6] : memref<1x128xf32, #tpu.memory_space<vmem>>, vector<1x128xf32>
    %cst = arith.constant dense<0.000000e+00> : vector<8xf32>
    %5 = vector.multi_reduction <add>, %1, %cst [1] : vector<8x128xf32> to vector<8xf32>
    %6 = vector.shape_cast %5 : vector<8xf32> to vector<8x1xf32>
    %cst_7 = arith.constant 1.280000e+02 : f32
    %7 = vector.broadcast %cst_7 : f32 to vector<8x1xf32>
    %8 = arith.divf %6, %7 : vector<8x1xf32>
    %9 = vector.broadcast %8 : vector<8x1xf32> to vector<8x128xf32>
    %10 = arith.subf %1, %9 : vector<8x128xf32>
    %11 = arith.mulf %10, %10 : vector<8x128xf32>
    %cst_8 = arith.constant dense<0.000000e+00> : vector<8xf32>
    %12 = vector.multi_reduction <add>, %11, %cst_8 [1] : vector<8x128xf32> to vector<8xf32>
    %13 = vector.shape_cast %12 : vector<8xf32> to vector<8x1xf32>
    %cst_9 = arith.constant 1.280000e+02 : f32
    %14 = vector.broadcast %cst_9 : f32 to vector<8x1xf32>
    %15 = arith.divf %13, %14 : vector<8x1xf32>
    %16 = vector.broadcast %8 : vector<8x1xf32> to vector<8x128xf32>
    %17 = arith.subf %1, %16 : vector<8x128xf32>
    %cst_10 = arith.constant 9.99999974E-6 : f32
    %18 = vector.broadcast %cst_10 : f32 to vector<8x1xf32>
    %19 = arith.addf %15, %18 : vector<8x1xf32>
    %20 = math.rsqrt %19 : vector<8x1xf32>
    %21 = vector.broadcast %20 : vector<8x1xf32> to vector<8x128xf32>
    %22 = arith.mulf %17, %21 : vector<8x128xf32>
    %23 = vector.broadcast %4 : vector<1x128xf32> to vector<8x128xf32>
    %24 = arith.mulf %22, %23 : vector<8x128xf32>
    %c0_11 = arith.constant 0 : index
    %c0_12 = arith.constant 0 : index
    %25 = vector.load %arg5[%c0_11, %c0_12] : memref<1x128xf32, #tpu.memory_space<vmem>>, vector<1x128xf32>
    %cst_13 = arith.constant dense<0.000000e+00> : vector<16xf32>
    %26 = vector.multi_reduction <add>, %3, %cst_13 [1] : vector<16x128xf32> to vector<16xf32>
    %27 = vector.shape_cast %26 : vector<16xf32> to vector<16x1xf32>
    %cst_14 = arith.constant 1.280000e+02 : f32
    %28 = vector.broadcast %cst_14 : f32 to vector<16x1xf32>
    %29 = arith.divf %27, %28 : vector<16x1xf32>
    %30 = vector.broadcast %29 : vector<16x1xf32> to vector<16x128xf32>
    %31 = arith.subf %3, %30 : vector<16x128xf32>
    %32 = arith.mulf %31, %31 : vector<16x128xf32>
    %cst_15 = arith.constant dense<0.000000e+00> : vector<16xf32>
    %33 = vector.multi_reduction <add>, %32, %cst_15 [1] : vector<16x128xf32> to vector<16xf32>
    %34 = vector.shape_cast %33 : vector<16xf32> to vector<16x1xf32>
    %cst_16 = arith.constant 1.280000e+02 : f32
    %35 = vector.broadcast %cst_16 : f32 to vector<16x1xf32>
    %36 = arith.divf %34, %35 : vector<16x1xf32>
    %37 = vector.broadcast %29 : vector<16x1xf32> to vector<16x128xf32>
    %38 = arith.subf %3, %37 : vector<16x128xf32>
    %cst_17 = arith.constant 9.99999974E-6 : f32
    %39 = vector.broadcast %cst_17 : f32 to vector<16x1xf32>
    %40 = arith.addf %36, %39 : vector<16x1xf32>
    %41 = math.rsqrt %40 : vector<16x1xf32>
    %42 = vector.broadcast %41 : vector<16x1xf32> to vector<16x128xf32>
    %43 = arith.mulf %38, %42 : vector<16x128xf32>
    %44 = vector.broadcast %25 : vector<1x128xf32> to vector<16x128xf32>
    %45 = arith.mulf %43, %44 : vector<16x128xf32>
    %46 = arith.truncf %24 : vector<8x128xf32> to vector<8x128xbf16>
    %47 = arith.truncf %45 : vector<16x128xf32> to vector<16x128xbf16>
    %48 = vector.shape_cast %46 : vector<8x128xbf16> to vector<1x8x128xbf16>
    %49 = vector.shape_cast %48 : vector<1x8x128xbf16> to vector<1x8x128xbf16>
    %50 = vector.broadcast %49 : vector<1x8x128xbf16> to vector<2x8x128xbf16>
    %c0_18 = arith.constant 0 : index
    %c0_19 = arith.constant 0 : index
    %c0_20 = arith.constant 0 : index
    %51 = vector.load %arg6[%c0_18, %c0_19, %c0_20] : memref<2x128x128xbf16, #tpu.memory_space<vmem>>, vector<2x128x128xbf16>
    "tpu.trace_start"() <{level = 10 : i32, message = "htd,hdf->htf"}> : () -> ()
    %cst_21 = arith.constant dense<0.000000e+00> : vector<2x8x128xf32>
    %52 = tpu.matmul %50, %51, %cst_21 {dimension_numbers = #tpu.dot_dimension_numbers<[2], [1], [1], [2], [0, 0, 0, 1, 1, 2], [0], [0]>} : vector<2x8x128xbf16>, vector<2x128x128xbf16>, vector<2x8x128xf32> -> vector<2x8x128xf32>
    "tpu.trace_stop"() : () -> ()
    %c0_22 = arith.constant 0 : index
    %c0_23 = arith.constant 0 : index
    %53 = vector.load %arg7[%c0_22, %c0_23] : memref<128x128xbf16, #tpu.memory_space<vmem>>, vector<128x128xbf16>
    %cst_24 = arith.constant dense<0.000000e+00> : vector<16x128xf32>
    %54 = tpu.matmul %47, %53, %cst_24 {dimension_numbers = #tpu.dot_dimension_numbers<[1], [0], [0], [1], [0, 0, 1, 1], [], []>} : vector<16x128xbf16>, vector<128x128xbf16>, vector<16x128xf32> -> vector<16x128xf32>
    %c0_25 = arith.constant 0 : index
    %c0_26 = arith.constant 0 : index
    %55 = vector.load %arg8[%c0_25, %c0_26] : memref<128x128xbf16, #tpu.memory_space<vmem>>, vector<128x128xbf16>
    %cst_27 = arith.constant dense<0.000000e+00> : vector<16x128xf32>
    %56 = tpu.matmul %47, %55, %cst_27 {dimension_numbers = #tpu.dot_dimension_numbers<[1], [0], [0], [1], [0, 0, 1, 1], [], []>} : vector<16x128xbf16>, vector<128x128xbf16>, vector<16x128xf32> -> vector<16x128xf32>
    %57 = arith.truncf %54 : vector<16x128xf32> to vector<16x128xbf16>
    %58 = vector.shape_cast %57 : vector<16x128xbf16> to vector<1x16x128xbf16>
    %59 = vector.shape_cast %58 : vector<1x16x128xbf16> to vector<1x16x128xbf16>
    %60 = vector.broadcast %59 : vector<1x16x128xbf16> to vector<2x16x128xbf16>
    %61 = arith.truncf %56 : vector<16x128xf32> to vector<16x128xbf16>
    %62 = vector.shape_cast %61 : vector<16x128xbf16> to vector<1x16x128xbf16>
    %63 = vector.shape_cast %62 : vector<1x16x128xbf16> to vector<1x16x128xbf16>
    %64 = vector.broadcast %63 : vector<1x16x128xbf16> to vector<2x16x128xbf16>
    %65 = arith.truncf %52 : vector<2x8x128xf32> to vector<2x8x128xbf16>
    "tpu.trace_start"() <{level = 10 : i32, message = "hqd,hkd->hqk"}> : () -> ()
    %cst_28 = arith.constant dense<0.000000e+00> : vector<2x8x16xf32>
    %66 = tpu.matmul %65, %60, %cst_28 {dimension_numbers = #tpu.dot_dimension_numbers<[2], [2], [1], [1], [0, 0, 0, 1, 1, 1], [0], [0]>} : vector<2x8x128xbf16>, vector<2x16x128xbf16>, vector<2x8x16xf32> -> vector<2x8x16xf32>
    "tpu.trace_stop"() : () -> ()
    %cst_29 = arith.constant dense<0xFF800000> : vector<2x8xf32>
    %67 = vector.multi_reduction <maximumf>, %66, %cst_29 [2] : vector<2x8x16xf32> to vector<2x8xf32>
    %68 = vector.shape_cast %67 : vector<2x8xf32> to vector<2x8x1xf32>
    %69 = vector.broadcast %68 : vector<2x8x1xf32> to vector<2x8x16xf32>
    %70 = arith.subf %66, %69 : vector<2x8x16xf32>
    %71 = math.exp %70 : vector<2x8x16xf32>
    %cst_30 = arith.constant dense<0.000000e+00> : vector<2x8xf32>
    %72 = vector.multi_reduction <add>, %71, %cst_30 [2] : vector<2x8x16xf32> to vector<2x8xf32>
    %73 = vector.shape_cast %72 : vector<2x8xf32> to vector<2x8x1xf32>
    %74 = tpu.reciprocal %73 {approx = true} : vector<2x8x1xf32> -> vector<2x8x1xf32>
    %75 = vector.broadcast %74 : vector<2x8x1xf32> to vector<2x8x16xf32>
    %76 = arith.mulf %71, %75 : vector<2x8x16xf32>
    %77 = arith.truncf %76 : vector<2x8x16xf32> to vector<2x8x16xbf16>
    "tpu.trace_start"() <{level = 10 : i32, message = "hqk,hkd->hqd"}> : () -> ()
    %cst_31 = arith.constant dense<0.000000e+00> : vector<2x8x128xf32>
    %78 = tpu.matmul %77, %64, %cst_31 {dimension_numbers = #tpu.dot_dimension_numbers<[2], [1], [1], [2], [0, 0, 0, 1, 1, 2], [0], [0]>} : vector<2x8x16xbf16>, vector<2x16x128xbf16>, vector<2x8x128xf32> -> vector<2x8x128xf32>
    "tpu.trace_stop"() : () -> ()
    %79 = arith.truncf %78 : vector<2x8x128xf32> to vector<2x8x128xbf16>
    %c0_32 = arith.constant 0 : index
    %c0_33 = arith.constant 0 : index
    %c0_34 = arith.constant 0 : index
    %80 = vector.load %arg9[%c0_32, %c0_33, %c0_34] : memref<2x128x128xbf16, #tpu.memory_space<vmem>>, vector<2x128x128xbf16>
    "tpu.trace_start"() <{level = 10 : i32, message = "hqd,hdf->hqf"}> : () -> ()
    %cst_35 = arith.constant dense<0.000000e+00> : vector<2x8x128xf32>
    %81 = tpu.matmul %79, %80, %cst_35 {dimension_numbers = #tpu.dot_dimension_numbers<[2], [1], [1], [2], [0, 0, 0, 1, 1, 2], [0], [0]>} : vector<2x8x128xbf16>, vector<2x128x128xbf16>, vector<2x8x128xf32> -> vector<2x8x128xf32>
    "tpu.trace_stop"() : () -> ()
    %cst_36 = arith.constant dense<0.000000e+00> : vector<8x128xf32>
    %82 = vector.multi_reduction <add>, %81, %cst_36 [0] : vector<2x8x128xf32> to vector<8x128xf32>
    %c0_37 = arith.constant 0 : index
    %c0_38 = arith.constant 0 : index
    %83 = vector.load %arg10[%c0_37, %c0_38] : memref<128x512xbf16, #tpu.memory_space<vmem>>, vector<128x512xbf16>
    %cst_39 = arith.constant dense<0.000000e+00> : vector<8x512xf32>
    %84 = tpu.matmul %46, %83, %cst_39 {dimension_numbers = #tpu.dot_dimension_numbers<[1], [0], [0], [1], [0, 0, 1, 1], [], []>} : vector<8x128xbf16>, vector<128x512xbf16>, vector<8x512xf32> -> vector<8x512xf32>
    %c0_40 = arith.constant 0 : index
    %c0_41 = arith.constant 0 : index
    %85 = vector.load %arg11[%c0_40, %c0_41] : memref<128x512xbf16, #tpu.memory_space<vmem>>, vector<128x512xbf16>
    %cst_42 = arith.constant dense<0.000000e+00> : vector<8x512xf32>
    %86 = tpu.matmul %46, %85, %cst_42 {dimension_numbers = #tpu.dot_dimension_numbers<[1], [0], [0], [1], [0, 0, 1, 1], [], []>} : vector<8x128xbf16>, vector<128x512xbf16>, vector<8x512xf32> -> vector<8x512xf32>
    %87 = arith.negf %86 : vector<8x512xf32>
    %88 = math.exp %87 : vector<8x512xf32>
    %cst_43 = arith.constant 1.000000e+00 : f32
    %89 = vector.broadcast %cst_43 : f32 to vector<8x512xf32>
    %90 = arith.addf %89, %88 : vector<8x512xf32>
    %91 = arith.divf %89, %90 : vector<8x512xf32>
    %92 = arith.mulf %86, %91 : vector<8x512xf32>
    %93 = arith.mulf %92, %84 : vector<8x512xf32>
    %94 = arith.truncf %93 : vector<8x512xf32> to vector<8x512xbf16>
    %c0_44 = arith.constant 0 : index
    %c0_45 = arith.constant 0 : index
    %95 = vector.load %arg12[%c0_44, %c0_45] : memref<512x128xbf16, #tpu.memory_space<vmem>>, vector<512x128xbf16>
    %cst_46 = arith.constant dense<0.000000e+00> : vector<8x128xf32>
    %96 = tpu.matmul %94, %95, %cst_46 {dimension_numbers = #tpu.dot_dimension_numbers<[1], [0], [0], [1], [0, 0, 1, 1], [], []>} : vector<8x512xbf16>, vector<512x128xbf16>, vector<8x128xf32> -> vector<8x128xf32>
    %97 = arith.addf %82, %96 : vector<8x128xf32>
    %c0_47 = arith.constant 0 : index
    %c0_48 = arith.constant 0 : index
    %c0_49 = arith.constant 0 : index
    %98 = vector.load %arg13[%c0_47, %c0_48, %c0_49] : memref<1x8x128xf32, #tpu.memory_space<vmem>>, vector<1x8x128xf32>
    %99 = vector.shape_cast %98 : vector<1x8x128xf32> to vector<8x128xf32>
    %100 = vector.shape_cast %97 : vector<8x128xf32> to vector<1x8x128xf32>
    tpu.vector_store %arg13[%c0_47, %c0_48, %c0_49], %100 {strides = array<i32>} : memref<1x8x128xf32, #tpu.memory_space<vmem>>, vector<1x8x128xf32>,
    return
  }
  func.func @transform_0(%arg0: i32, %arg1: i32) -> (i32, i32, i32) {
    %c0_i32 = arith.constant 0 : i32
    %c0_i32_0 = arith.constant 0 : i32
    return %arg0, %arg1, %c0_i32 : i32, i32, i32
  }
  func.func @transform_1(%arg0: i32, %arg1: i32) -> (i32, i32, i32) {
    %c0_i32 = arith.constant 0 : i32
    %c0_i32_0 = arith.constant 0 : i32
    %c0_i32_1 = arith.constant 0 : i32
    return %arg0, %c0_i32, %c0_i32_0 : i32, i32, i32
  }
  func.func @transform_2(%arg0: i32, %arg1: i32) -> (i32, i32) {
    %c0_i32 = arith.constant 0 : i32
    %c0_i32_0 = arith.constant 0 : i32
    %c0_i32_1 = arith.constant 0 : i32
    return %c0_i32, %c0_i32_0 : i32, i32
  }
  func.func @transform_3(%arg0: i32, %arg1: i32) -> (i32, i32) {
    %c0_i32 = arith.constant 0 : i32
    %c0_i32_0 = arith.constant 0 : i32
    %c0_i32_1 = arith.constant 0 : i32
    return %c0_i32, %c0_i32_0 : i32, i32
  }
  func.func @transform_4(%arg0: i32, %arg1: i32) -> (i32, i32, i32) {
    %c0_i32 = arith.constant 0 : i32
    %c0_i32_0 = arith.constant 0 : i32
    %c0_i32_1 = arith.constant 0 : i32
    %c0_i32_2 = arith.constant 0 : i32
    return %c0_i32, %c0_i32_0, %c0_i32_1 : i32, i32, i32
  }
  func.func @transform_5(%arg0: i32, %arg1: i32) -> (i32, i32) {
    %c0_i32 = arith.constant 0 : i32
    %c0_i32_0 = arith.constant 0 : i32
    %c0_i32_1 = arith.constant 0 : i32
    return %c0_i32, %c0_i32_0 : i32, i32
  }
  func.func @transform_6(%arg0: i32, %arg1: i32) -> (i32, i32) {
    %c0_i32 = arith.constant 0 : i32
    %c0_i32_0 = arith.constant 0 : i32
    %c0_i32_1 = arith.constant 0 : i32
    return %c0_i32, %c0_i32_0 : i32, i32
  }
  func.func @transform_7(%arg0: i32, %arg1: i32) -> (i32, i32, i32) {
    %c0_i32 = arith.constant 0 : i32
    %c0_i32_0 = arith.constant 0 : i32
    %c0_i32_1 = arith.constant 0 : i32
    %c0_i32_2 = arith.constant 0 : i32
    return %c0_i32, %c0_i32_0, %c0_i32_1 : i32, i32, i32
  }
  func.func @transform_8(%arg0: i32, %arg1: i32) -> (i32, i32) {
    %c0_i32 = arith.constant 0 : i32
    %c0_i32_0 = arith.constant 0 : i32
    %c0_i32_1 = arith.constant 0 : i32
    return %c0_i32, %c0_i32_0 : i32, i32
  }
  func.func @transform_9(%arg0: i32, %arg1: i32) -> (i32, i32) {
    %c0_i32 = arith.constant 0 : i32
    %c0_i32_0 = arith.constant 0 : i32
    %c0_i32_1 = arith.constant 0 : i32
    return %c0_i32, %c0_i32_0 : i32, i32
  }
  func.func @transform_10(%arg0: i32, %arg1: i32) -> (i32, i32) {
    %c0_i32 = arith.constant 0 : i32
    %c0_i32_0 = arith.constant 0 : i32
    %c0_i32_1 = arith.constant 0 : i32
    return %c0_i32, %c0_i32_0 : i32, i32
  }
  func.func @transform_11(%arg0: i32, %arg1: i32) -> (i32, i32, i32) {
    %c0_i32 = arith.constant 0 : i32
    %c0_i32_0 = arith.constant 0 : i32
    return %arg0, %arg1, %c0_i32 : i32, i32, i32
  }
}

</mosaic_0001>

<llo_original>
// kernel: tpu_custom_call.1
$region0: #{tpu_custom_call.1}
  #allocation0 [shape = 'u32[]', space=smem, size = 0x4, offset = 0x4, fixed_abs, tag = 'smem constant byte address 0x4 - core index']
  #allocation1 [shape = 'u32[144,128]{1,0:T(1,128)}', space=vmem, size = 0x12000, scoped, tag = 'internal scratch']
  %s0 = inlined_call_operand.hbm [shape: f32[2,16,128], index: 0, kind: input, shape index: {}]
  %s1 = inlined_call_operand.hbm [shape: f32[2,16,128], index: 1, kind: input, shape index: {}]
  %s2 = inlined_call_operand.vmem [shape: f32[1,128], index: 2, kind: input, shape index: {}]
  %s3 = inlined_call_operand.vmem [shape: f32[1,128], index: 3, kind: input, shape index: {}]
  %s4 = inlined_call_operand.hbm [shape: bf16[2,128,128], index: 4, kind: input, shape index: {}]
  %s5 = inlined_call_operand.hbm [shape: bf16[128,128], index: 5, kind: input, shape index: {}]
  %s6 = inlined_call_operand.hbm [shape: bf16[128,128], index: 6, kind: input, shape index: {}]
  %s7 = inlined_call_operand.hbm [shape: bf16[2,128,128], index: 7, kind: input, shape index: {}]
  %s8 = inlined_call_operand.hbm [shape: bf16[128,512], index: 8, kind: input, shape index: {}]
  %s9 = inlined_call_operand.hbm [shape: bf16[128,512], index: 9, kind: input, shape index: {}]
  %s10 = inlined_call_operand.hbm [shape: bf16[512,128], index: 10, kind: input, shape index: {}]
  %s11 = inlined_call_operand.hbm [shape: f32[2,16,128], index: 11, kind: output, shape index: {}]
  %s12 = sld [smem:[#allocation0]]
  $region113: #{tpu_custom_call.1} parent=0
    _
  %s14 = ssub.s32 1, %s12
  %s15 = scalar_select 0, %s14, %s12
  $region1: #{tpu_custom_call.1} parent=0
    #allocation2 [shape = 'u8[8192]{0}', space=vmem, size = 0x2000, scoped, tag = 'input window, operand 0']
    #allocation3 [shape = 's32[2]{0}', space=sflag, size = 0x8, scoped, tag = 'scoped memory for tpu_custom_call.1']
    #allocation4 [shape = 's32[2]{0}', space=sflag, size = 0x8, scoped, tag = 'scoped memory for tpu_custom_call.1']
    #allocation5 [shape = 'u8[16384]{0}', space=vmem, size = 0x4000, scoped, tag = 'input window, operand 1']
    #allocation6 [shape = 's32[2]{0}', space=sflag, size = 0x8, scoped, tag = 'scoped memory for tpu_custom_call.1']
    #allocation7 [shape = 'u8[65536]{0}', space=vmem, size = 0x10000, scoped, tag = 'input window, operand 4, single buffered']
    #allocation8 [shape = 'u8[32768]{0}', space=vmem, size = 0x8000, scoped, tag = 'input window, operand 5, single buffered']
    #allocation9 [shape = 's32[1]{0}', space=sflag, size = 0x4, scoped, tag = 'scoped memory for tpu_custom_call.1']
    #allocation10 [shape = 'u8[32768]{0}', space=vmem, size = 0x8000, scoped, tag = 'input window, operand 6, single buffered']
    #allocation11 [shape = 'u8[65536]{0}', space=vmem, size = 0x10000, scoped, tag = 'input window, operand 7, single buffered']
    #allocation12 [shape = 's32[1]{0}', space=sflag, size = 0x4, scoped, tag = 'scoped memory for tpu_custom_call.1']
    #allocation13 [shape = 'u8[131072]{0}', space=vmem, size = 0x20000, scoped, tag = 'input window, operand 8, single buffered']
    #allocation14 [shape = 'u8[131072]{0}', space=vmem, size = 0x20000, scoped, tag = 'input window, operand 9, single buffered']
    #allocation15 [shape = 's32[1]{0}', space=sflag, size = 0x4, scoped, tag = 'scoped memory for tpu_custom_call.1']
    #allocation16 [shape = 'u8[131072]{0}', space=vmem, size = 0x20000, scoped, tag = 'input window, operand 10, single buffered']
    #allocation17 [shape = 'u8[8192]{0}', space=vmem, size = 0x2000, scoped, tag = 'output window, operand 0']
    %16 = vsyncpa [#allocation3], 0
    %s17 = scalar_lea.sflag [#allocation3], 1
    %18 = vsyncpa %s17, 0
    %19 = vsyncpa [#allocation6], 0
    %s20 = scalar_lea.sflag [#allocation6], 1
    %21 = vsyncpa %s20, 0
    %22 = vsyncpa [#allocation9], 0
    %23 = vsyncpa [#allocation12], 0
    %24 = vsyncpa [#allocation15], 0
    %25 = vsyncpa [#allocation4], 0
    %s26 = scalar_lea.sflag [#allocation4], 1
    %27 = vsyncpa %s26, 0
    loop: start=0, step=1, limit=6
    $region2: #{tpu_custom_call.1} parent=1 // loop_pre_header
      _
    $region3: #{tpu_custom_call.1} parent=1 // loop_header
      %s29 = sphi 0, %s33
      %p30 = scmp.ge.s32.totalorder %s29, 6
      %s36 = sphi 0, %s48
      %s37 = sphi 0, %s44
      %s38 = sphi 0, %s36
      %s39 = sphi 0, %s37
      %s40 = sphi 0, %s38
      %s41 = sphi 0, %s39
      %s53 = sphi 0, %s55
      %s56 = sphi 0, %s53
      %s57 = sphi 0, %s56
      %s73 = sphi 0, %s57
      %s79 = sphi 0, %s81
      %s82 = sphi 0, %s79
      %s83 = sphi 0, %s82
      %s99 = sphi 0, %s83
      %s103 = sphi 0, %s103
      %s105 = sphi 0, %s103
      %s106 = sphi 0, %s105
      %s120 = sphi 0, %s106
      %s124 = sphi 0, %s124
      %s126 = sphi 0, %s124
      %s127 = sphi 0, %s126
      %s141 = sphi 0, %s127
      %s145 = sphi 0, %s145
      %s147 = sphi 0, %s145
      %s148 = sphi 0, %s147
      %s162 = sphi 0, %s148
      %s166 = sphi 0, %s166
      %s168 = sphi 0, %s166
      %s169 = sphi 0, %s168
      %s183 = sphi 0, %s169
      %s187 = sphi 0, %s187
      %s189 = sphi 0, %s187
      %s190 = sphi 0, %s189
      %s204 = sphi 0, %s190
      %s208 = sphi 0, %s208
      %s210 = sphi 0, %s208
      %s211 = sphi 0, %s210
      %s225 = sphi 0, %s211
      %s229 = sphi 0, %s229
      %s231 = sphi 0, %s229
      %s232 = sphi 0, %s231
      %s246 = sphi 0, %s232
      %s250 = sphi 0, %s250
      %s252 = sphi 0, %s250
      %s253 = sphi 0, %s252
      %s267 = sphi 0, %s253
      %s271 = sphi 0, %s271
      %s273 = sphi 0, %s271
      %s274 = sphi 0, %s273
      %s288 = sphi 0, %s274
      %s296 = sphi 0, %s298
      %s299 = sphi 0, %s296
      %s300 = sphi 0, %s299
      %s316 = sphi 0, %s300
    $region4: #{tpu_custom_call.1} parent=1 // loop_header_branch
      %32 = sbr.rel (%p30) target = $region8
    $region5: #{tpu_custom_call.1} parent=1 // loop_body
      %s34 = ssub.s32 %s29, 1
      %s35 = ssub.s32 %s29, 2
      %s42 = sadd.s32 1, %s37
      %p43 = scmp.ge.s32.totalorder %s42, 2
      %s44 = scalar_select %p43, 0, %s42
      %s45 = sadd.s32 1, %s36
      %s46 = scalar_select %p43, %s45, %s36
      %p47 = scmp.ge.s32.totalorder %s46, 2
      %s48 = scalar_select %p47, 0, %s46
      %s49 = ssub.s32 %s36, %s48
      %s50 = ssub.s32 %s37, %s44
      %s51 = sor.u32 %s49, %s50
      %p52 = scmp.eq.s32.totalorder %s51, 0
      %s54 = sadd.s32 %s53, 1
      %s55 = scalar_select %p52, %s53, %s54
      %p58 = pneg %p52
      %p59 = scmp.eq.s32.totalorder %s29, 3
      %p60 = por %p58, %p59
      %p61 = scmp.ne.s32.totalorder %s53, %s56
      %p62 = scmp.eq.s32.totalorder %s29, 0
      %p63 = por %p61, %p62
      %p64 = scmp.ne.s32.totalorder %s53, %s56
      %p65 = scmp.eq.s32.totalorder %s34, 3
      %p66 = por %p64, %p65
      %p67 = scmp.ne.s32.totalorder %s56, %s57
      %p68 = scmp.eq.s32.totalorder %s34, 0
      %p69 = por %p67, %p68
      %p70 = scmp.ne.s32.totalorder %s56, %s57
      %p71 = scmp.eq.s32.totalorder %s35, 3
      %p72 = por %p70, %p71
      %p74 = scmp.ne.s32.totalorder %s57, %s73
      %p75 = scmp.eq.s32.totalorder %s35, 0
      %p76 = por %p74, %p75
      %s77 = ssub.s32 %s36, %s48
      %p78 = scmp.eq.s32.totalorder %s77, 0
      %s80 = sadd.s32 %s79, 1
      %s81 = scalar_select %p78, %s79, %s80
      %p84 = pneg %p78
      %p85 = scmp.eq.s32.totalorder %s29, 3
      %p86 = por %p84, %p85
      %p87 = scmp.ne.s32.totalorder %s79, %s82
      %p88 = scmp.eq.s32.totalorder %s29, 0
      %p89 = por %p87, %p88
      %p90 = scmp.ne.s32.totalorder %s79, %s82
      %p91 = scmp.eq.s32.totalorder %s34, 3
      %p92 = por %p90, %p91
      %p93 = scmp.ne.s32.totalorder %s82, %s83
      %p94 = scmp.eq.s32.totalorder %s34, 0
      %p95 = por %p93, %p94
      %p96 = scmp.ne.s32.totalorder %s82, %s83
      %p97 = scmp.eq.s32.totalorder %s35, 3
      %p98 = por %p96, %p97
      %p100 = scmp.ne.s32.totalorder %s83, %s99
      %p101 = scmp.eq.s32.totalorder %s35, 0
      %p102 = por %p100, %p101
      %s104 = sadd.s32 %s103, 1
      %p107 = scmp.eq.s32.totalorder %s29, 3
      %p108 = scmp.ne.s32.totalorder %s103, %s105
      %p109 = scmp.eq.s32.totalorder %s29, 0
      %p110 = por %p108, %p109
      %p111 = scmp.ne.s32.totalorder %s103, %s105
      %p112 = scmp.eq.s32.totalorder %s34, 3
      %p113 = por %p111, %p112
      %p114 = scmp.ne.s32.totalorder %s105, %s106
      %p115 = scmp.eq.s32.totalorder %s34, 0
      %p116 = por %p114, %p115
      %p117 = scmp.ne.s32.totalorder %s105, %s106
      %p118 = scmp.eq.s32.totalorder %s35, 3
      %p119 = por %p117, %p118
      %p121 = scmp.ne.s32.totalorder %s106, %s120
      %p122 = scmp.eq.s32.totalorder %s35, 0
      %p123 = por %p121, %p122
      %s125 = sadd.s32 %s124, 1
      %p128 = scmp.eq.s32.totalorder %s29, 3
      %p129 = scmp.ne.s32.totalorder %s124, %s126
      %p130 = scmp.eq.s32.totalorder %s29, 0
      %p131 = por %p129, %p130
      %p132 = scmp.ne.s32.totalorder %s124, %s126
      %p133 = scmp.eq.s32.totalorder %s34, 3
      %p134 = por %p132, %p133
      %p135 = scmp.ne.s32.totalorder %s126, %s127
      %p136 = scmp.eq.s32.totalorder %s34, 0
      %p137 = por %p135, %p136
      %p138 = scmp.ne.s32.totalorder %s126, %s127
      %p139 = scmp.eq.s32.totalorder %s35, 3
      %p140 = por %p138, %p139
      %p142 = scmp.ne.s32.totalorder %s127, %s141
      %p143 = scmp.eq.s32.totalorder %s35, 0
      %p144 = por %p142, %p143
      %s146 = sadd.s32 %s145, 1
      %p149 = scmp.eq.s32.totalorder %s29, 3
      %p150 = scmp.ne.s32.totalorder %s145, %s147
      %p151 = scmp.eq.s32.totalorder %s29, 0
      %p152 = por %p150, %p151
      %p153 = scmp.ne.s32.totalorder %s145, %s147
      %p154 = scmp.eq.s32.totalorder %s34, 3
      %p155 = por %p153, %p154
      %p156 = scmp.ne.s32.totalorder %s147, %s148
      %p157 = scmp.eq.s32.totalorder %s34, 0
      %p158 = por %p156, %p157
      %p159 = scmp.ne.s32.totalorder %s147, %s148
      %p160 = scmp.eq.s32.totalorder %s35, 3
      %p161 = por %p159, %p160
      %p163 = scmp.ne.s32.totalorder %s148, %s162
      %p164 = scmp.eq.s32.totalorder %s35, 0
      %p165 = por %p163, %p164
      %s167 = sadd.s32 %s166, 1
      %p170 = scmp.eq.s32.totalorder %s29, 3
      %p171 = scmp.ne.s32.totalorder %s166, %s168
      %p172 = scmp.eq.s32.totalorder %s29, 0
      %p173 = por %p171, %p172
      %p174 = scmp.ne.s32.totalorder %s166, %s168
      %p175 = scmp.eq.s32.totalorder %s34, 3
      %p176 = por %p174, %p175
      %p177 = scmp.ne.s32.totalorder %s168, %s169
      %p178 = scmp.eq.s32.totalorder %s34, 0
      %p179 = por %p177, %p178
      %p180 = scmp.ne.s32.totalorder %s168, %s169
      %p181 = scmp.eq.s32.totalorder %s35, 3
      %p182 = por %p180, %p181
      %p184 = scmp.ne.s32.totalorder %s169, %s183
      %p185 = scmp.eq.s32.totalorder %s35, 0
      %p186 = por %p184, %p185
      %s188 = sadd.s32 %s187, 1
      %p191 = scmp.eq.s32.totalorder %s29, 3
      %p192 = scmp.ne.s32.totalorder %s187, %s189
      %p193 = scmp.eq.s32.totalorder %s29, 0
      %p194 = por %p192, %p193
      %p195 = scmp.ne.s32.totalorder %s187, %s189
      %p196 = scmp.eq.s32.totalorder %s34, 3
      %p197 = por %p195, %p196
      %p198 = scmp.ne.s32.totalorder %s189, %s190
      %p199 = scmp.eq.s32.totalorder %s34, 0
      %p200 = por %p198, %p199
      %p201 = scmp.ne.s32.totalorder %s189, %s190
      %p202 = scmp.eq.s32.totalorder %s35, 3
      %p203 = por %p201, %p202
      %p205 = scmp.ne.s32.totalorder %s190, %s204
      %p206 = scmp.eq.s32.totalorder %s35, 0
      %p207 = por %p205, %p206
      %s209 = sadd.s32 %s208, 1
      %p212 = scmp.eq.s32.totalorder %s29, 3
      %p213 = scmp.ne.s32.totalorder %s208, %s210
      %p214 = scmp.eq.s32.totalorder %s29, 0
      %p215 = por %p213, %p214
      %p216 = scmp.ne.s32.totalorder %s208, %s210
      %p217 = scmp.eq.s32.totalorder %s34, 3
      %p218 = por %p216, %p217
      %p219 = scmp.ne.s32.totalorder %s210, %s211
      %p220 = scmp.eq.s32.totalorder %s34, 0
      %p221 = por %p219, %p220
      %p222 = scmp.ne.s32.totalorder %s210, %s211
      %p223 = scmp.eq.s32.totalorder %s35, 3
      %p224 = por %p222, %p223
      %p226 = scmp.ne.s32.totalorder %s211, %s225
      %p227 = scmp.eq.s32.totalorder %s35, 0
      %p228 = por %p226, %p227
      %s230 = sadd.s32 %s229, 1
      %p233 = scmp.eq.s32.totalorder %s29, 3
      %p234 = scmp.ne.s32.totalorder %s229, %s231
      %p235 = scmp.eq.s32.totalorder %s29, 0
      %p236 = por %p234, %p235
      %p237 = scmp.ne.s32.totalorder %s229, %s231
      %p238 = scmp.eq.s32.totalorder %s34, 3
      %p239 = por %p237, %p238
      %p240 = scmp.ne.s32.totalorder %s231, %s232
      %p241 = scmp.eq.s32.totalorder %s34, 0
      %p242 = por %p240, %p241
      %p243 = scmp.ne.s32.totalorder %s231, %s232
      %p244 = scmp.eq.s32.totalorder %s35, 3
      %p245 = por %p243, %p244
      %p247 = scmp.ne.s32.totalorder %s232, %s246
      %p248 = scmp.eq.s32.totalorder %s35, 0
      %p249 = por %p247, %p248
      %s251 = sadd.s32 %s250, 1
      %p254 = scmp.eq.s32.totalorder %s29, 3
      %p255 = scmp.ne.s32.totalorder %s250, %s252
      %p256 = scmp.eq.s32.totalorder %s29, 0
      %p257 = por %p255, %p256
      %p258 = scmp.ne.s32.totalorder %s250, %s252
      %p259 = scmp.eq.s32.totalorder %s34, 3
      %p260 = por %p258, %p259
      %p261 = scmp.ne.s32.totalorder %s252, %s253
      %p262 = scmp.eq.s32.totalorder %s34, 0
      %p263 = por %p261, %p262
      %p264 = scmp.ne.s32.totalorder %s252, %s253
      %p265 = scmp.eq.s32.totalorder %s35, 3
      %p266 = por %p264, %p265
      %p268 = scmp.ne.s32.totalorder %s253, %s267
      %p269 = scmp.eq.s32.totalorder %s35, 0
      %p270 = por %p268, %p269
      %s272 = sadd.s32 %s271, 1
      %p275 = scmp.eq.s32.totalorder %s29, 3
      %p276 = scmp.ne.s32.totalorder %s271, %s273
      %p277 = scmp.eq.s32.totalorder %s29, 0
      %p278 = por %p276, %p277
      %p279 = scmp.ne.s32.totalorder %s271, %s273
      %p280 = scmp.eq.s32.totalorder %s34, 3
      %p281 = por %p279, %p280
      %p282 = scmp.ne.s32.totalorder %s273, %s274
      %p283 = scmp.eq.s32.totalorder %s34, 0
      %p284 = por %p282, %p283
      %p285 = scmp.ne.s32.totalorder %s273, %s274
      %p286 = scmp.eq.s32.totalorder %s35, 3
      %p287 = por %p285, %p286
      %p289 = scmp.ne.s32.totalorder %s274, %s288
      %p290 = scmp.eq.s32.totalorder %s35, 0
      %p291 = por %p289, %p290
      %s292 = ssub.s32 %s36, %s48
      %s293 = ssub.s32 %s37, %s44
      %s294 = sor.u32 %s292, %s293
      %p295 = scmp.eq.s32.totalorder %s294, 0
      %s297 = sadd.s32 %s296, 1
      %s298 = scalar_select %p295, %s296, %s297
      %p301 = pneg %p295
      %p302 = scmp.eq.s32.totalorder %s29, 3
      %p303 = por %p301, %p302
      %p304 = scmp.ne.s32.totalorder %s296, %s299
      %p305 = scmp.eq.s32.totalorder %s29, 0
      %p306 = por %p304, %p305
      %p307 = scmp.ne.s32.totalorder %s296, %s299
      %p308 = scmp.eq.s32.totalorder %s34, 3
      %p309 = por %p307, %p308
      %p310 = scmp.ne.s32.totalorder %s299, %s300
      %p311 = scmp.eq.s32.totalorder %s34, 0
      %p312 = por %p310, %p311
      %p313 = scmp.ne.s32.totalorder %s299, %s300
      %p314 = scmp.eq.s32.totalorder %s35, 3
      %p315 = por %p313, %p314
      %p317 = scmp.ne.s32.totalorder %s300, %s316
      %p318 = scmp.eq.s32.totalorder %s35, 0
      %p319 = por %p317, %p318
      %p320 = scmp.le.s32.totalorder 1, %s29
      %p321 = scmp.lt.s32.totalorder %s29, 5
      %p322 = pnand %p320, %p321
      %p323 = pneg %p322
      // Predicated region
      $region9: #{tpu_custom_call.1} parent=5 // pred_check
        _
      $region10: #{tpu_custom_call.1} parent=5 // pred_check_branch
        %325 = sbr.rel (%p322) target = $region12
      $region11: #{tpu_custom_call.1} parent=5 // pred_region
        %s326 = ssub.s32 %s29, 1
        // Predicated region
        $region13: #{tpu_custom_call.1} parent=11 // pred_check
          %p327 = pneg %p116
        $region14: #{tpu_custom_call.1} parent=11 // pred_check_branch
          %329 = sbr.rel (%p327) target = $region16
        $region15: #{tpu_custom_call.1} parent=11 // pred_region
          _
        $region16: #{tpu_custom_call.1} parent=11 // pred_fallthru
          _
        // Predicated region
        $region17: #{tpu_custom_call.1} parent=11 // pred_check
          %p330 = pneg %p137
        $region18: #{tpu_custom_call.1} parent=11 // pred_check_branch
          %332 = sbr.rel (%p330) target = $region20
        $region19: #{tpu_custom_call.1} parent=11 // pred_region
          _
        $region20: #{tpu_custom_call.1} parent=11 // pred_fallthru
          _
        // Predicated region
        $region21: #{tpu_custom_call.1} parent=11 // pred_check
          %p333 = pneg %p158
        $region22: #{tpu_custom_call.1} parent=11 // pred_check_branch
          %335 = sbr.rel (%p333) target = $region24
        $region23: #{tpu_custom_call.1} parent=11 // pred_region
          %s337 = ssub.s32 2048, 2048
          %338 = vsyncadd [#allocation6], %s337
          %s339 = sshll.u32 [#allocation7], 4
          %s340 = int_to_ptr.vmem [resolvable:$true] %s339
          %345 = dma.hbm_to_vmem [thread:$0]  %s4, 2048, %s340, [#allocation6], 64, 64, 4
        $region24: #{tpu_custom_call.1} parent=11 // pred_fallthru
          _
        // Predicated region
        $region25: #{tpu_custom_call.1} parent=11 // pred_check
          %p346 = pneg %p179
        $region26: #{tpu_custom_call.1} parent=11 // pred_check_branch
          %348 = sbr.rel (%p346) target = $region28
        $region27: #{tpu_custom_call.1} parent=11 // pred_region
          %s350 = ssub.s32 1024, 1024
          %351 = vsyncadd [#allocation9], %s350
          %s352 = sshll.u32 [#allocation8], 4
          %s353 = int_to_ptr.vmem [resolvable:$true] %s352
          %358 = dma.hbm_to_vmem [thread:$0]  %s5, 1024, %s353, [#allocation9], 64, 64, 4
        $region28: #{tpu_custom_call.1} parent=11 // pred_fallthru
          _
        // Predicated region
        $region29: #{tpu_custom_call.1} parent=11 // pred_check
          %p359 = pneg %p200
        $region30: #{tpu_custom_call.1} parent=11 // pred_check_branch
          %361 = sbr.rel (%p359) target = $region32
        $region31: #{tpu_custom_call.1} parent=11 // pred_region
          %s363 = ssub.s32 1024, 1024
          %364 = vsyncadd [#allocation9], %s363
          %s365 = sshll.u32 [#allocation10], 4
          %s366 = int_to_ptr.vmem [resolvable:$true] %s365
          %371 = dma.hbm_to_vmem [thread:$0]  %s6, 1024, %s366, [#allocation9], 64, 64, 4
        $region32: #{tpu_custom_call.1} parent=11 // pred_fallthru
          _
        // Predicated region
        $region33: #{tpu_custom_call.1} parent=11 // pred_check
          %p372 = pneg %p221
        $region34: #{tpu_custom_call.1} parent=11 // pred_check_branch
          %374 = sbr.rel (%p372) target = $region36
        $region35: #{tpu_custom_call.1} parent=11 // pred_region
          %s376 = ssub.s32 2048, 2048
          %377 = vsyncadd [#allocation12], %s376
          %s378 = sshll.u32 [#allocation11], 4
          %s379 = int_to_ptr.vmem [resolvable:$true] %s378
          %384 = dma.hbm_to_vmem [thread:$0]  %s7, 2048, %s379, [#allocation12], 64, 64, 4
        $region36: #{tpu_custom_call.1} parent=11 // pred_fallthru
          _
        // Predicated region
        $region37: #{tpu_custom_call.1} parent=11 // pred_check
          %p385 = pneg %p242
        $region38: #{tpu_custom_call.1} parent=11 // pred_check_branch
          %387 = sbr.rel (%p385) target = $region40
        $region39: #{tpu_custom_call.1} parent=11 // pred_region
          %s389 = ssub.s32 4096, 4096
          %390 = vsyncadd [#allocation12], %s389
          %s391 = sshll.u32 [#allocation13], 4
          %s392 = int_to_ptr.vmem [resolvable:$true] %s391
          %397 = dma.hbm_to_vmem [thread:$0]  %s8, 4096, %s392, [#allocation12], 256, 256, 16
        $region40: #{tpu_custom_call.1} parent=11 // pred_fallthru
          _
        // Predicated region
        $region41: #{tpu_custom_call.1} parent=11 // pred_check
          %p398 = pneg %p263
        $region42: #{tpu_custom_call.1} parent=11 // pred_check_branch
          %400 = sbr.rel (%p398) target = $region44
        $region43: #{tpu_custom_call.1} parent=11 // pred_region
          %s402 = ssub.s32 4096, 4096
          %403 = vsyncadd [#allocation15], %s402
          %s404 = sshll.u32 [#allocation14], 4
          %s405 = int_to_ptr.vmem [resolvable:$true] %s404
          %410 = dma.hbm_to_vmem [thread:$0]  %s9, 4096, %s405, [#allocation15], 256, 256, 16
        $region44: #{tpu_custom_call.1} parent=11 // pred_fallthru
          _
        // Predicated region
        $region45: #{tpu_custom_call.1} parent=11 // pred_check
          %p411 = pneg %p284
        $region46: #{tpu_custom_call.1} parent=11 // pred_check_branch
          %413 = sbr.rel (%p411) target = $region48
        $region47: #{tpu_custom_call.1} parent=11 // pred_region
          %s415 = ssub.s32 4096, 4096
          %416 = vsyncadd [#allocation15], %s415
          %s417 = sshll.u32 [#allocation16], 4
          %s418 = int_to_ptr.vmem [resolvable:$true] %s417
          %423 = dma.hbm_to_vmem [thread:$0]  %s10, 4096, %s418, [#allocation15], 64, 64, 4
        $region48: #{tpu_custom_call.1} parent=11 // pred_fallthru
          _
      $region12: #{tpu_custom_call.1} parent=5 // pred_fallthru
        _
      %p424 = scmp.lt.s32.totalorder %s29, 4
      // Predicated region
      $region49: #{tpu_custom_call.1} parent=5 // pred_check
        %p425 = pneg %p424
      $region50: #{tpu_custom_call.1} parent=5 // pred_check_branch
        %427 = sbr.rel (%p425) target = $region52
      $region51: #{tpu_custom_call.1} parent=5 // pred_region
        // Predicated region
        $region53: #{tpu_custom_call.1} parent=51 // pred_check
          %p428 = pneg %p63
        $region54: #{tpu_custom_call.1} parent=51 // pred_check_branch
          %430 = sbr.rel (%p428) target = $region56
        $region55: #{tpu_custom_call.1} parent=51 // pred_region
          %s431 = sand.u32 %s53, 1
          %s432 = scalar_lea.sflag [#allocation3], %s431
          %s433 = sand.u32 %s53, 1
          %s434 = smul.addr %s433, 8
          %s435 = scalar_lea.vmem [#allocation2], %s434
          %s437 = ssub.s32 128, 128
          %438 = vsyncadd %s432, %s437
          %s439 = smul.addr %s36, 2
          %s440 = sadd.s32 %s37, %s439
          %s441 = smul.addr %s440, 128
          %s442 = scalar_lea.hbm %s0, %s441
          %s444 = sshll.u32 %s435, 4
          %s445 = int_to_ptr.vmem [resolvable:$true] %s444
          %447 = dma.hbm_to_vmem [thread:$0]  %s442, 128, %s445, %s432
        $region56: #{tpu_custom_call.1} parent=51 // pred_fallthru
          _
        // Predicated region
        $region57: #{tpu_custom_call.1} parent=51 // pred_check
          %p448 = pneg %p89
        $region58: #{tpu_custom_call.1} parent=51 // pred_check_branch
          %450 = sbr.rel (%p448) target = $region60
        $region59: #{tpu_custom_call.1} parent=51 // pred_region
          %s451 = sand.u32 %s29, 1
          %s452 = scalar_lea.sflag [#allocation6], %s451
          %s453 = sand.u32 %s79, 1
          %s454 = smul.addr %s453, 16
          %s455 = scalar_lea.vmem [#allocation5], %s454
          %s457 = ssub.s32 256, 256
          %458 = vsyncadd %s452, %s457
          %s459 = smul.addr %s36, 2
          %s460 = smul.addr %s459, 128
          %s461 = scalar_lea.hbm %s1, %s460
          %s462 = sshll.u32 %s455, 4
          %s463 = int_to_ptr.vmem [resolvable:$true] %s462
          %468 = dma.hbm_to_vmem [thread:$0]  %s461, 256, %s463, %s452, 128, 128, 8
        $region60: #{tpu_custom_call.1} parent=51 // pred_fallthru
          _
      $region52: #{tpu_custom_call.1} parent=5 // pred_fallthru
        _
      %p469 = scmp.le.s32.totalorder 1, %s29
      %p470 = scmp.lt.s32.totalorder %s29, 5
      %p471 = pnand %p469, %p470
      %p472 = pneg %p471
      // Predicated region
      $region61: #{tpu_custom_call.1} parent=5 // pred_check
        _
      $region62: #{tpu_custom_call.1} parent=5 // pred_check_branch
        %474 = sbr.rel (%p471) target = $region64
      $region63: #{tpu_custom_call.1} parent=5 // pred_region
        %s475 = ssub.s32 %s29, 1
        %s476 = sand.u32 %s56, 1
        %s477 = scalar_lea.sflag [#allocation3], %s476
        %s478 = sand.u32 %s56, 1
        %s479 = smul.addr %s478, 8
        %s480 = scalar_lea.vmem [#allocation2], %s479
        // Predicated region
        $region65: #{tpu_custom_call.1} parent=63 // pred_check
          %p481 = pneg %p69
        $region66: #{tpu_custom_call.1} parent=63 // pred_check_branch
          %483 = sbr.rel (%p481) target = $region68
        $region67: #{tpu_custom_call.1} parent=63 // pred_region
          %484 = dma.done %s477, 128
        $region68: #{tpu_custom_call.1} parent=63 // pred_fallthru
          _
        %s485 = sand.u32 %s34, 1
        %s486 = scalar_lea.sflag [#allocation6], %s485
        %s487 = sand.u32 %s82, 1
        %s488 = smul.addr %s487, 16
        %s489 = scalar_lea.vmem [#allocation5], %s488
        // Predicated region
        $region69: #{tpu_custom_call.1} parent=63 // pred_check
          %p490 = pneg %p95
        $region70: #{tpu_custom_call.1} parent=63 // pred_check_branch
          %492 = sbr.rel (%p490) target = $region72
        $region71: #{tpu_custom_call.1} parent=63 // pred_region
          %493 = dma.done %s486, 256
        $region72: #{tpu_custom_call.1} parent=63 // pred_fallthru
          _
        // Predicated region
        $region73: #{tpu_custom_call.1} parent=63 // pred_check
          %p494 = pneg %p158
        $region74: #{tpu_custom_call.1} parent=63 // pred_check_branch
          %496 = sbr.rel (%p494) target = $region76
        $region75: #{tpu_custom_call.1} parent=63 // pred_region
          %497 = dma.done [#allocation6], 2048
        $region76: #{tpu_custom_call.1} parent=63 // pred_fallthru
          _
        // Predicated region
        $region77: #{tpu_custom_call.1} parent=63 // pred_check
          %p498 = pneg %p179
        $region78: #{tpu_custom_call.1} parent=63 // pred_check_branch
          %500 = sbr.rel (%p498) target = $region80
        $region79: #{tpu_custom_call.1} parent=63 // pred_region
          %501 = dma.done [#allocation9], 1024
        $region80: #{tpu_custom_call.1} parent=63 // pred_fallthru
          _
        // Predicated region
        $region81: #{tpu_custom_call.1} parent=63 // pred_check
          %p502 = pneg %p200
        $region82: #{tpu_custom_call.1} parent=63 // pred_check_branch
          %504 = sbr.rel (%p502) target = $region84
        $region83: #{tpu_custom_call.1} parent=63 // pred_region
          %505 = dma.done [#allocation9], 1024
        $region84: #{tpu_custom_call.1} parent=63 // pred_fallthru
          _
        // Predicated region
        $region85: #{tpu_custom_call.1} parent=63 // pred_check
          %p506 = pneg %p221
        $region86: #{tpu_custom_call.1} parent=63 // pred_check_branch
          %508 = sbr.rel (%p506) target = $region88
        $region87: #{tpu_custom_call.1} parent=63 // pred_region
          %509 = dma.done [#allocation12], 2048
        $region88: #{tpu_custom_call.1} parent=63 // pred_fallthru
          _
        // Predicated region
        $region89: #{tpu_custom_call.1} parent=63 // pred_check
          %p510 = pneg %p242
        $region90: #{tpu_custom_call.1} parent=63 // pred_check_branch
          %512 = sbr.rel (%p510) target = $region92
        $region91: #{tpu_custom_call.1} parent=63 // pred_region
          %513 = dma.done [#allocation12], 4096
        $region92: #{tpu_custom_call.1} parent=63 // pred_fallthru
          _
        // Predicated region
        $region93: #{tpu_custom_call.1} parent=63 // pred_check
          %p514 = pneg %p263
        $region94: #{tpu_custom_call.1} parent=63 // pred_check_branch
          %516 = sbr.rel (%p514) target = $region96
        $region95: #{tpu_custom_call.1} parent=63 // pred_region
          %517 = dma.done [#allocation15], 4096
        $region96: #{tpu_custom_call.1} parent=63 // pred_fallthru
          _
        // Predicated region
        $region97: #{tpu_custom_call.1} parent=63 // pred_check
          %p518 = pneg %p284
        $region98: #{tpu_custom_call.1} parent=63 // pred_check_branch
          %520 = sbr.rel (%p518) target = $region100
        $region99: #{tpu_custom_call.1} parent=63 // pred_region
          %521 = dma.done [#allocation15], 4096
        $region100: #{tpu_custom_call.1} parent=63 // pred_fallthru
          _
        %s522 = sand.u32 %s56, 1
        %s523 = scalar_lea.sflag [#allocation3], %s522
        %s524 = sand.u32 %s56, 1
        %s525 = smul.addr %s524, 8
        %s526 = scalar_lea.vmem [#allocation2], %s525
        %p527 = pneg %p69
        %p528 = pneg %p66
        %s529 = sand.u32 %s34, 1
        %s530 = scalar_lea.sflag [#allocation6], %s529
        %s531 = sand.u32 %s82, 1
        %s532 = smul.addr %s531, 16
        %s533 = scalar_lea.vmem [#allocation5], %s532
        %p534 = pneg %p95
        %p535 = pneg %p92
        %p536 = pneg %p116
        %p537 = pneg %p113
        %p538 = pneg %p137
        %p539 = pneg %p134
        %p540 = pneg %p158
        %p541 = pneg %p155
        %p542 = pneg %p179
        %p543 = pneg %p176
        %p544 = pneg %p200
        %p545 = pneg %p197
        %p546 = pneg %p221
        %p547 = pneg %p218
        %p548 = pneg %p242
        %p549 = pneg %p239
        %p550 = pneg %p263
        %p551 = pneg %p260
        %p552 = pneg %p284
        %p553 = pneg %p281
        %p554 = pneg %p312
        %p555 = pneg %p309
        %s556 = sand.u32 %s299, 1
        %s557 = scalar_lea.sflag [#allocation4], %s556
        %s558 = sand.u32 %s299, 1
        %s559 = smul.addr %s558, 8
        %s560 = scalar_lea.vmem [#allocation17], %s559
        %v562 = vld [vmem:[%s480] sm:$0xff]
        %v563 = vld [vmem:[%s489] sm:$0xff]
        %v564 = vld [vmem:[%s489 + $0x8] sm:$0xff]
        %v565 = vld [vmem:[%s2] sm:$0x1]
        %566 = vadd.xlane.f32.xlu0 %v562
        %v567 = vpop.xlane.xlu0 %566
        %v568 = vrcp.pop 128.0
        %v569 = vmul.f32 %v567, %v568
        %v570 = vsub.f32 %v562, %v569
        %v571 = vmul.f32 %v570, %v570
        %572 = vadd.xlane.f32.xlu0 %v571
        %v573 = vpop.xlane.xlu0 %572
        %v574 = vmul.f32 %v573, %v568
        %v575 = vadd.f32 %v574, 1e-05
        %v576 = vrsqrt.pop %v575
        %v577 = vmul.f32 %v570, %v576
        %v579 = vlaneseq
        %v580 = vshrl.u32 %v579, 7
        %v581 = vsub.s32 0, %v580
        %v582 = vrot.slane %v565, %v581
        %v584 = vmul.f32 %v577, %v582
        %v585 = vld [vmem:[%s3] sm:$0x1]
        %586 = vadd.xlane.f32.xlu0 %v563
        %v587 = vpop.xlane.xlu0 %586
        %588 = vadd.xlane.f32.xlu0 %v564
        %v589 = vpop.xlane.xlu0 %588
        %v590 = vmul.f32 %v587, %v568
        %v591 = vmul.f32 %v589, %v568
        %v592 = vsub.f32 %v563, %v590
        %v593 = vsub.f32 %v564, %v591
        %v594 = vmul.f32 %v592, %v592
        %v595 = vmul.f32 %v593, %v593
        %596 = vadd.xlane.f32.xlu0 %v594
        %v597 = vpop.xlane.xlu0 %596
        %598 = vadd.xlane.f32.xlu0 %v595
        %v599 = vpop.xlane.xlu0 %598
        %v600 = vmul.f32 %v597, %v568
        %v601 = vmul.f32 %v599, %v568
        %v602 = vadd.f32 %v600, 1e-05
        %v603 = vadd.f32 %v601, 1e-05
        %v604 = vrsqrt.pop %v602
        %v605 = vrsqrt.pop %v603
        %v606 = vmul.f32 %v592, %v604
        %v607 = vmul.f32 %v593, %v605
        %v609 = vlaneseq
        %v610 = vshrl.u32 %v609, 7
        %v611 = vsub.s32 0, %v610
        %v612 = vrot.slane %v585, %v611
        %v614 = vmul.f32 %v606, %v612
        %v615 = vmul.f32 %v607, %v612
        %v616 = vpack.c.bf16 %v584, %v584
        %v617 = vpack.c.bf16 %v615, %v614
        %v618 = vld [vmem:[#allocation7] sm:$0xf]
        %v619 = vld [vmem:[#allocation7 + $0x4] sm:$0xf]
        %v620 = vld [vmem:[#allocation7 + $0x8] sm:$0xf]
        %v621 = vld [vmem:[#allocation7 + $0xc] sm:$0xf]
        %v622 = vld [vmem:[#allocation7 + $0x10] sm:$0xf]
        %v623 = vld [vmem:[#allocation7 + $0x14] sm:$0xf]
        %v624 = vld [vmem:[#allocation7 + $0x18] sm:$0xf]
        %v625 = vld [vmem:[#allocation7 + $0x1c] sm:$0xf]
        %v626 = vld [vmem:[#allocation7 + $0x20] sm:$0xf]
        %v627 = vld [vmem:[#allocation7 + $0x24] sm:$0xf]
        %v628 = vld [vmem:[#allocation7 + $0x28] sm:$0xf]
        %v629 = vld [vmem:[#allocation7 + $0x2c] sm:$0xf]
        %v630 = vld [vmem:[#allocation7 + $0x30] sm:$0xf]
        %v631 = vld [vmem:[#allocation7 + $0x34] sm:$0xf]
        %v632 = vld [vmem:[#allocation7 + $0x38] sm:$0xf]
        %v633 = vld [vmem:[#allocation7 + $0x3c] sm:$0xf]
        %v634 = vld [vmem:[#allocation7 + $0x40] sm:$0xf]
        %v635 = vld [vmem:[#allocation7 + $0x44] sm:$0xf]
        %v636 = vld [vmem:[#allocation7 + $0x48] sm:$0xf]
        %v637 = vld [vmem:[#allocation7 + $0x4c] sm:$0xf]
        %v638 = vld [vmem:[#allocation7 + $0x50] sm:$0xf]
        %v639 = vld [vmem:[#allocation7 + $0x54] sm:$0xf]
        %v640 = vld [vmem:[#allocation7 + $0x58] sm:$0xf]
        %v641 = vld [vmem:[#allocation7 + $0x5c] sm:$0xf]
        %v642 = vld [vmem:[#allocation7 + $0x60] sm:$0xf]
        %v643 = vld [vmem:[#allocation7 + $0x64] sm:$0xf]
        %v644 = vld [vmem:[#allocation7 + $0x68] sm:$0xf]
        %v645 = vld [vmem:[#allocation7 + $0x6c] sm:$0xf]
        %v646 = vld [vmem:[#allocation7 + $0x70] sm:$0xf]
        %v647 = vld [vmem:[#allocation7 + $0x74] sm:$0xf]
        %v648 = vld [vmem:[#allocation7 + $0x78] sm:$0xf]
        %v649 = vld [vmem:[#allocation7 + $0x7c] sm:$0xf]
        %v666 = vunpack.c.l.b16 %v618
        %v667 = vunpack.c.l.b16 %v619
        %v668 = vunpack.c.l.b16 %v620
        %v669 = vunpack.c.l.b16 %v621
        %v670 = vunpack.c.l.b16 %v622
        %v671 = vunpack.c.l.b16 %v623
        %v672 = vunpack.c.l.b16 %v624
        %v673 = vunpack.c.l.b16 %v625
        %v674 = vunpack.c.l.b16 %v626
        %v675 = vunpack.c.l.b16 %v627
        %v676 = vunpack.c.l.b16 %v628
        %v677 = vunpack.c.l.b16 %v629
        %v678 = vunpack.c.l.b16 %v630
        %v679 = vunpack.c.l.b16 %v631
        %v680 = vunpack.c.l.b16 %v632
        %v681 = vunpack.c.l.b16 %v633
        %v682 = vpack.c.b16 %v667, %v666
        %v683 = vpack.c.b16 %v669, %v668
        %v684 = vpack.c.b16 %v671, %v670
        %v685 = vpack.c.b16 %v673, %v672
        %v686 = vpack.c.b16 %v675, %v674
        %v687 = vpack.c.b16 %v677, %v676
        %v688 = vpack.c.b16 %v679, %v678
        %v689 = vpack.c.b16 %v681, %v680
        %698 = vmatprep.subr.bf16.mxu0 0
        %699 = vmatpush1.bf16.msra.mxu0 %v682
        %700 = vmatprep.subr.bf16.mxu0 0
        %701 = vmatpush1.bf16.msra.mxu0 %v683
        %702 = vmatprep.subr.bf16.mxu0 0
        %703 = vmatpush1.bf16.msra.mxu0 %v684
        %704 = vmatprep.subr.bf16.mxu0 0
        %705 = vmatpush1.bf16.msra.mxu0 %v685
        %706 = vmatprep.subr.bf16.mxu0 0
        %707 = vmatpush1.bf16.msra.mxu0 %v686
        %708 = vmatprep.subr.bf16.mxu0 0
        %709 = vmatpush1.bf16.msra.mxu0 %v687
        %710 = vmatprep.subr.bf16.mxu0 0
        %711 = vmatpush1.bf16.msra.mxu0 %v688
        %712 = vmatprep.subr.bf16.mxu0 0
        %713 = vmatpush1.bf16.msra.mxu0 %v689
        %714 = vmatprep.subr.bf16.mxu0 0
        %715 = vmatpush1.bf16.msra.mxu0 0
        %716 = vmatprep.subr.bf16.mxu0 0
        %717 = vmatpush1.bf16.msra.mxu0 0
        %718 = vmatprep.subr.bf16.mxu0 0
        %719 = vmatpush1.bf16.msra.mxu0 0
        %720 = vmatprep.subr.bf16.mxu0 0
        %721 = vmatpush1.bf16.msra.mxu0 0
        %722 = vmatprep.subr.bf16.mxu0 0
        %723 = vmatpush1.bf16.msra.mxu0 0
        %724 = vmatprep.subr.bf16.mxu0 0
        %725 = vmatpush1.bf16.msra.mxu0 0
        %726 = vmatprep.subr.bf16.mxu0 0
        %727 = vmatpush1.bf16.msra.mxu0 0
        %728 = vmatprep.subr.bf16.mxu0 0
        %729 = vmatpush1.bf16.msra.mxu0 0
        %730 = vmatprep.mubr.bf16.mxu0 0
        %731 = vmatmul.mubr.bf16.gmra.mrb[0].mxu0 %v616
        %v732 = vpop.f32.mrb[0].mxu0
        %v733 = vadd.f32 0.0, %v732
        %v734 = vpop.f32.mrb[0].mxu0
        %v735 = vpop.f32.mrb[0].mxu0
        %v736 = vpop.f32.mrb[0].mxu0
        %737 = vdwg.mxu0
        %v754 = vunpack.c.l.b16 %v634
        %v755 = vunpack.c.l.b16 %v635
        %v756 = vunpack.c.l.b16 %v636
        %v757 = vunpack.c.l.b16 %v637
        %v758 = vunpack.c.l.b16 %v638
        %v759 = vunpack.c.l.b16 %v639
        %v760 = vunpack.c.l.b16 %v640
        %v761 = vunpack.c.l.b16 %v641
        %v762 = vunpack.c.l.b16 %v642
        %v763 = vunpack.c.l.b16 %v643
        %v764 = vunpack.c.l.b16 %v644
        %v765 = vunpack.c.l.b16 %v645
        %v766 = vunpack.c.l.b16 %v646
        %v767 = vunpack.c.l.b16 %v647
        %v768 = vunpack.c.l.b16 %v648
        %v769 = vunpack.c.l.b16 %v649
        %v770 = vpack.c.b16 %v755, %v754
        %v771 = vpack.c.b16 %v757, %v756
        %v772 = vpack.c.b16 %v759, %v758
        %v773 = vpack.c.b16 %v761, %v760
        %v774 = vpack.c.b16 %v763, %v762
        %v775 = vpack.c.b16 %v765, %v764
        %v776 = vpack.c.b16 %v767, %v766
        %v777 = vpack.c.b16 %v769, %v768
        %786 = vmatprep.subr.bf16.mxu0 0
        %787 = vmatpush1.bf16.msra.mxu0 %v770
        %788 = vmatprep.subr.bf16.mxu0 0
        %789 = vmatpush1.bf16.msra.mxu0 %v771
        %790 = vmatprep.subr.bf16.mxu0 0
        %791 = vmatpush1.bf16.msra.mxu0 %v772
        %792 = vmatprep.subr.bf16.mxu0 0
        %793 = vmatpush1.bf16.msra.mxu0 %v773
        %794 = vmatprep.subr.bf16.mxu0 0
        %795 = vmatpush1.bf16.msra.mxu0 %v774
        %796 = vmatprep.subr.bf16.mxu0 0
        %797 = vmatpush1.bf16.msra.mxu0 %v775
        %798 = vmatprep.subr.bf16.mxu0 0
        %799 = vmatpush1.bf16.msra.mxu0 %v776
        %800 = vmatprep.subr.bf16.mxu0 0
        %801 = vmatpush1.bf16.msra.mxu0 %v777
        %802 = vmatprep.subr.bf16.mxu0 0
        %803 = vmatpush1.bf16.msra.mxu0 0
        %804 = vmatprep.subr.bf16.mxu0 0
        %805 = vmatpush1.bf16.msra.mxu0 0
        %806 = vmatprep.subr.bf16.mxu0 0
        %807 = vmatpush1.bf16.msra.mxu0 0
        %808 = vmatprep.subr.bf16.mxu0 0
        %809 = vmatpush1.bf16.msra.mxu0 0
        %810 = vmatprep.subr.bf16.mxu0 0
        %811 = vmatpush1.bf16.msra.mxu0 0
        %812 = vmatprep.subr.bf16.mxu0 0
        %813 = vmatpush1.bf16.msra.mxu0 0
        %814 = vmatprep.subr.bf16.mxu0 0
        %815 = vmatpush1.bf16.msra.mxu0 0
        %816 = vmatprep.subr.bf16.mxu0 0
        %817 = vmatpush1.bf16.msra.mxu0 0
        %818 = vmatprep.mubr.bf16.mxu0 0
        %819 = vmatmul.mubr.bf16.gmra.mrb[0].mxu0 %v616
        %v820 = vpop.f32.mrb[0].mxu0
        %v821 = vadd.f32 0.0, %v820
        %v822 = vpop.f32.mrb[0].mxu0
        %v823 = vpop.f32.mrb[0].mxu0
        %v824 = vpop.f32.mrb[0].mxu0
        %825 = vdwg.mxu0
        %v826 = vld [vmem:[#allocation8] sm:$0xf]
        %v827 = vld [vmem:[#allocation8 + $0x4] sm:$0xf]
        %v828 = vld [vmem:[#allocation8 + $0x8] sm:$0xf]
        %v829 = vld [vmem:[#allocation8 + $0xc] sm:$0xf]
        %v830 = vld [vmem:[#allocation8 + $0x10] sm:$0xf]
        %v831 = vld [vmem:[#allocation8 + $0x14] sm:$0xf]
        %v832 = vld [vmem:[#allocation8 + $0x18] sm:$0xf]
        %v833 = vld [vmem:[#allocation8 + $0x1c] sm:$0xf]
        %v834 = vld [vmem:[#allocation8 + $0x20] sm:$0xf]
        %v835 = vld [vmem:[#allocation8 + $0x24] sm:$0xf]
        %v836 = vld [vmem:[#allocation8 + $0x28] sm:$0xf]
        %v837 = vld [vmem:[#allocation8 + $0x2c] sm:$0xf]
        %v838 = vld [vmem:[#allocation8 + $0x30] sm:$0xf]
        %v839 = vld [vmem:[#allocation8 + $0x34] sm:$0xf]
        %v840 = vld [vmem:[#allocation8 + $0x38] sm:$0xf]
        %v841 = vld [vmem:[#allocation8 + $0x3c] sm:$0xf]
        %v858 = vunpack.c.l.b16 %v826
        %v859 = vunpack.c.l.b16 %v827
        %v860 = vunpack.c.l.b16 %v828
        %v861 = vunpack.c.l.b16 %v829
        %v862 = vunpack.c.l.b16 %v830
        %v863 = vunpack.c.l.b16 %v831
        %v864 = vunpack.c.l.b16 %v832
        %v865 = vunpack.c.l.b16 %v833
        %v866 = vunpack.c.l.b16 %v834
        %v867 = vunpack.c.l.b16 %v835
        %v868 = vunpack.c.l.b16 %v836
        %v869 = vunpack.c.l.b16 %v837
        %v870 = vunpack.c.l.b16 %v838
        %v871 = vunpack.c.l.b16 %v839
        %v872 = vunpack.c.l.b16 %v840
        %v873 = vunpack.c.l.b16 %v841
        %v874 = vpack.c.b16 %v859, %v858
        %v875 = vpack.c.b16 %v861, %v860
        %v876 = vpack.c.b16 %v863, %v862
        %v877 = vpack.c.b16 %v865, %v864
        %v878 = vpack.c.b16 %v867, %v866
        %v879 = vpack.c.b16 %v869, %v868
        %v880 = vpack.c.b16 %v871, %v870
        %v881 = vpack.c.b16 %v873, %v872
        %890 = vmatprep.subr.bf16.mxu0 0
        %891 = vmatpush1.bf16.msra.mxu0 %v874
        %892 = vmatprep.subr.bf16.mxu0 0
        %893 = vmatpush1.bf16.msra.mxu0 %v875
        %894 = vmatprep.subr.bf16.mxu0 0
        %895 = vmatpush1.bf16.msra.mxu0 %v876
        %896 = vmatprep.subr.bf16.mxu0 0
        %897 = vmatpush1.bf16.msra.mxu0 %v877
        %898 = vmatprep.subr.bf16.mxu0 0
        %899 = vmatpush1.bf16.msra.mxu0 %v878
        %900 = vmatprep.subr.bf16.mxu0 0
        %901 = vmatpush1.bf16.msra.mxu0 %v879
        %902 = vmatprep.subr.bf16.mxu0 0
        %903 = vmatpush1.bf16.msra.mxu0 %v880
        %904 = vmatprep.subr.bf16.mxu0 0
        %905 = vmatpush1.bf16.msra.mxu0 %v881
        %906 = vmatprep.subr.bf16.mxu0 0
        %907 = vmatpush1.bf16.msra.mxu0 0
        %908 = vmatprep.subr.bf16.mxu0 0
        %909 = vmatpush1.bf16.msra.mxu0 0
        %910 = vmatprep.subr.bf16.mxu0 0
        %911 = vmatpush1.bf16.msra.mxu0 0
        %912 = vmatprep.subr.bf16.mxu0 0
        %913 = vmatpush1.bf16.msra.mxu0 0
        %914 = vmatprep.subr.bf16.mxu0 0
        %915 = vmatpush1.bf16.msra.mxu0 0
        %916 = vmatprep.subr.bf16.mxu0 0
        %917 = vmatpush1.bf16.msra.mxu0 0
        %918 = vmatprep.subr.bf16.mxu0 0
        %919 = vmatpush1.bf16.msra.mxu0 0
        %920 = vmatprep.subr.bf16.mxu0 0
        %921 = vmatpush1.bf16.msra.mxu0 0
        %922 = vmatprep.mubr.bf16.mxu0 0
        %923 = vmatmul.mubr.bf16.gmra.mrb[0].mxu0 %v617
        %v924 = vpop.f32.mrb[0].mxu0
        %v925 = vadd.f32 0.0, %v924
        %v926 = vpop.f32.mrb[0].mxu0
        %v927 = vpop.f32.mrb[0].mxu0
        %v928 = vadd.f32 0.0, %v927
        %v929 = vpop.f32.mrb[0].mxu0
        %930 = vdwg.mxu0
        %v931 = vld [vmem:[#allocation10] sm:$0xf]
        %v932 = vld [vmem:[#allocation10 + $0x4] sm:$0xf]
        %v933 = vld [vmem:[#allocation10 + $0x8] sm:$0xf]
        %v934 = vld [vmem:[#allocation10 + $0xc] sm:$0xf]
        %v935 = vld [vmem:[#allocation10 + $0x10] sm:$0xf]
        %v936 = vld [vmem:[#allocation10 + $0x14] sm:$0xf]
        %v937 = vld [vmem:[#allocation10 + $0x18] sm:$0xf]
        %v938 = vld [vmem:[#allocation10 + $0x1c] sm:$0xf]
        %v939 = vld [vmem:[#allocation10 + $0x20] sm:$0xf]
        %v940 = vld [vmem:[#allocation10 + $0x24] sm:$0xf]
        %v941 = vld [vmem:[#allocation10 + $0x28] sm:$0xf]
        %v942 = vld [vmem:[#allocation10 + $0x2c] sm:$0xf]
        %v943 = vld [vmem:[#allocation10 + $0x30] sm:$0xf]
        %v944 = vld [vmem:[#allocation10 + $0x34] sm:$0xf]
        %v945 = vld [vmem:[#allocation10 + $0x38] sm:$0xf]
        %v946 = vld [vmem:[#allocation10 + $0x3c] sm:$0xf]
        %v963 = vunpack.c.l.b16 %v931
        %v964 = vunpack.c.l.b16 %v932
        %v965 = vunpack.c.l.b16 %v933
        %v966 = vunpack.c.l.b16 %v934
        %v967 = vunpack.c.l.b16 %v935
        %v968 = vunpack.c.l.b16 %v936
        %v969 = vunpack.c.l.b16 %v937
        %v970 = vunpack.c.l.b16 %v938
        %v971 = vunpack.c.l.b16 %v939
        %v972 = vunpack.c.l.b16 %v940
        %v973 = vunpack.c.l.b16 %v941
        %v974 = vunpack.c.l.b16 %v942
        %v975 = vunpack.c.l.b16 %v943
        %v976 = vunpack.c.l.b16 %v944
        %v977 = vunpack.c.l.b16 %v945
        %v978 = vunpack.c.l.b16 %v946
        %v979 = vpack.c.b16 %v964, %v963
        %v980 = vpack.c.b16 %v966, %v965
        %v981 = vpack.c.b16 %v968, %v967
        %v982 = vpack.c.b16 %v970, %v969
        %v983 = vpack.c.b16 %v972, %v971
        %v984 = vpack.c.b16 %v974, %v973
        %v985 = vpack.c.b16 %v976, %v975
        %v986 = vpack.c.b16 %v978, %v977
        %995 = vmatprep.subr.bf16.mxu0 0
        %996 = vmatpush1.bf16.msra.mxu0 %v979
        %997 = vmatprep.subr.bf16.mxu0 0
        %998 = vmatpush1.bf16.msra.mxu0 %v980
        %999 = vmatprep.subr.bf16.mxu0 0
        %1000 = vmatpush1.bf16.msra.mxu0 %v981
        %1001 = vmatprep.subr.bf16.mxu0 0
        %1002 = vmatpush1.bf16.msra.mxu0 %v982
        %1003 = vmatprep.subr.bf16.mxu0 0
        %1004 = vmatpush1.bf16.msra.mxu0 %v983
        %1005 = vmatprep.subr.bf16.mxu0 0
        %1006 = vmatpush1.bf16.msra.mxu0 %v984
        %1007 = vmatprep.subr.bf16.mxu0 0
        %1008 = vmatpush1.bf16.msra.mxu0 %v985
        %1009 = vmatprep.subr.bf16.mxu0 0
        %1010 = vmatpush1.bf16.msra.mxu0 %v986
        %1011 = vmatprep.subr.bf16.mxu0 0
        %1012 = vmatpush1.bf16.msra.mxu0 0
        %1013 = vmatprep.subr.bf16.mxu0 0
        %1014 = vmatpush1.bf16.msra.mxu0 0
        %1015 = vmatprep.subr.bf16.mxu0 0
        %1016 = vmatpush1.bf16.msra.mxu0 0
        %1017 = vmatprep.subr.bf16.mxu0 0
        %1018 = vmatpush1.bf16.msra.mxu0 0
        %1019 = vmatprep.subr.bf16.mxu0 0
        %1020 = vmatpush1.bf16.msra.mxu0 0
        %1021 = vmatprep.subr.bf16.mxu0 0
        %1022 = vmatpush1.bf16.msra.mxu0 0
        %1023 = vmatprep.subr.bf16.mxu0 0
        %1024 = vmatpush1.bf16.msra.mxu0 0
        %1025 = vmatprep.subr.bf16.mxu0 0
        %1026 = vmatpush1.bf16.msra.mxu0 0
        %1027 = vmatprep.mubr.bf16.mxu0 0
        %1028 = vmatmul.mubr.bf16.gmra.mrb[0].mxu0 %v617
        %v1029 = vpop.f32.mrb[0].mxu0
        %v1030 = vadd.f32 0.0, %v1029
        %v1031 = vpop.f32.mrb[0].mxu0
        %v1032 = vpop.f32.mrb[0].mxu0
        %v1033 = vadd.f32 0.0, %v1032
        %v1034 = vpop.f32.mrb[0].mxu0
        %1035 = vdwg.mxu0
        %v1036 = vpack.c.bf16 %v928, %v925
        %v1037 = vpack.c.bf16 %v1033, %v1030
        %v1038 = vpack.c.bf16 %v733, %v733
        %v1039 = vpack.c.bf16 %v821, %v821
        %1040 = vmatprep.subr.bf16.mxu0 0
        %1041 = vmatpush1.bf16.xpose.msra.mxu0 %v1036
        %1042 = vmatprep.subr.bf16.mxu0 0
        %1043 = vmatpush1.bf16.xpose.msra.mxu0 0
        %1044 = vmatprep.subr.bf16.mxu0 0
        %1045 = vmatpush1.bf16.xpose.msra.mxu0 0
        %1046 = vmatprep.subr.bf16.mxu0 0
        %1047 = vmatpush1.bf16.xpose.msra.mxu0 0
        %1048 = vmatprep.subr.bf16.mxu0 0
        %1049 = vmatpush1.bf16.xpose.msra.mxu0 0
        %1050 = vmatprep.subr.bf16.mxu0 0
        %1051 = vmatpush1.bf16.xpose.msra.mxu0 0
        %1052 = vmatprep.subr.bf16.mxu0 0
        %1053 = vmatpush1.bf16.xpose.msra.mxu0 0
        %1054 = vmatprep.subr.bf16.mxu0 0
        %1055 = vmatpush1.bf16.xpose.msra.mxu0 0
        %1056 = vmatprep.subr.bf16.mxu0 0
        %1057 = vmatpush1.bf16.xpose.msra.mxu0 0
        %1058 = vmatprep.subr.bf16.mxu0 0
        %1059 = vmatpush1.bf16.xpose.msra.mxu0 0
        %1060 = vmatprep.subr.bf16.mxu0 0
        %1061 = vmatpush1.bf16.xpose.msra.mxu0 0
        %1062 = vmatprep.subr.bf16.mxu0 0
        %1063 = vmatpush1.bf16.xpose.msra.mxu0 0
        %1064 = vmatprep.subr.bf16.mxu0 0
        %1065 = vmatpush1.bf16.xpose.msra.mxu0 0
        %1066 = vmatprep.subr.bf16.mxu0 0
        %1067 = vmatpush1.bf16.xpose.msra.mxu0 0
        %1068 = vmatprep.subr.bf16.mxu0 0
        %1069 = vmatpush1.bf16.xpose.msra.mxu0 0
        %1070 = vmatprep.subr.bf16.mxu0 0
        %1071 = vmatpush1.bf16.xpose.msra.mxu0 0
        %1072 = vmatprep.mubr.bf16.mxu0 0
        %1073 = vmatmul.mubr.bf16.gmra.mrb[0].mxu0 %v1038
        %v1074 = vpop.f32.mrb[0].mxu0
        %v1075 = vadd.f32 0.0, %v1074
        %v1076 = vpop.f32.mrb[0].mxu0
        %v1077 = vpop.f32.mrb[0].mxu0
        %v1078 = vpop.f32.mrb[0].mxu0
        %1079 = vdwg.mxu0
        %1080 = vmatprep.subr.bf16.mxu0 0
        %1081 = vmatpush1.bf16.xpose.msra.mxu0 %v1036
        %1082 = vmatprep.subr.bf16.mxu0 0
        %1083 = vmatpush1.bf16.xpose.msra.mxu0 0
        %1084 = vmatprep.subr.bf16.mxu0 0
        %1085 = vmatpush1.bf16.xpose.msra.mxu0 0
        %1086 = vmatprep.subr.bf16.mxu0 0
        %1087 = vmatpush1.bf16.xpose.msra.mxu0 0
        %1088 = vmatprep.subr.bf16.mxu0 0
        %1089 = vmatpush1.bf16.xpose.msra.mxu0 0
        %1090 = vmatprep.subr.bf16.mxu0 0
        %1091 = vmatpush1.bf16.xpose.msra.mxu0 0
        %1092 = vmatprep.subr.bf16.mxu0 0
        %1093 = vmatpush1.bf16.xpose.msra.mxu0 0
        %1094 = vmatprep.subr.bf16.mxu0 0
        %1095 = vmatpush1.bf16.xpose.msra.mxu0 0
        %1096 = vmatprep.subr.bf16.mxu0 0
        %1097 = vmatpush1.bf16.xpose.msra.mxu0 0
        %1098 = vmatprep.subr.bf16.mxu0 0
        %1099 = vmatpush1.bf16.xpose.msra.mxu0 0
        %1100 = vmatprep.subr.bf16.mxu0 0
        %1101 = vmatpush1.bf16.xpose.msra.mxu0 0
        %1102 = vmatprep.subr.bf16.mxu0 0
        %1103 = vmatpush1.bf16.xpose.msra.mxu0 0
        %1104 = vmatprep.subr.bf16.mxu0 0
        %1105 = vmatpush1.bf16.xpose.msra.mxu0 0
        %1106 = vmatprep.subr.bf16.mxu0 0
        %1107 = vmatpush1.bf16.xpose.msra.mxu0 0
        %1108 = vmatprep.subr.bf16.mxu0 0
        %1109 = vmatpush1.bf16.xpose.msra.mxu0 0
        %1110 = vmatprep.subr.bf16.mxu0 0
        %1111 = vmatpush1.bf16.xpose.msra.mxu0 0
        %1112 = vmatprep.mubr.bf16.mxu0 0
        %1113 = vmatmul.mubr.bf16.gmra.mrb[0].mxu0 %v1039
        %v1114 = vpop.f32.mrb[0].mxu0
        %v1115 = vadd.f32 0.0, %v1114
        %v1116 = vpop.f32.mrb[0].mxu0
        %v1117 = vpop.f32.mrb[0].mxu0
        %v1118 = vpop.f32.mrb[0].mxu0
        %1119 = vdwg.mxu0
        %vm1120 = vcmask 130048
        %v1121 = vsel %vm1120, %v1075, -inf
        %1122 = vmax.xlane.f32.xlu0 %v1121
        %v1123 = vpop.xlane.xlu0 %1122
        %v1124 = vsel %vm1120, %v1115, -inf
        %1125 = vmax.xlane.f32.xlu0 %v1124
        %v1126 = vpop.xlane.xlu0 %1125
        %v1127 = vsub.f32 %v1075, %v1123
        %v1128 = vsub.f32 %v1115, %v1126
        %v1129 = vmul.f32 %v1127, 1.442695
        %v1130 = vpow.pop %v1129
        %v1131 = vmul.f32 %v1128, 1.442695
        %v1132 = vpow.pop %v1131
        %v1133 = vsel %vm1120, %v1130, 0.0
        %1134 = vadd.xlane.f32.xlu0 %v1133
        %v1135 = vpop.xlane.xlu0 %1134
        %v1136 = vsel %vm1120, %v1132, 0.0
        %1137 = vadd.xlane.f32.xlu0 %v1136
        %v1138 = vpop.xlane.xlu0 %1137
        %v1139 = vrcp.pop %v1135
        %v1140 = vrcp.pop %v1138
        %v1141 = vmul.f32 %v1130, %v1139
        %v1142 = vmul.f32 %v1132, %v1140
        %v1143 = vpack.c.bf16 %v1141, %v1141
        %v1144 = vpack.c.bf16 %v1142, %v1142
        %v1146 = vsel %vm1120, %v1143, 0
        %1148 = vmatprep.subr.bf16.mxu0 0
        %1149 = vmatpush1.bf16.msra.mxu0 %v1037
        %1150 = vmatprep.subr.bf16.mxu0 0
        %1151 = vmatpush1.bf16.msra.mxu0 0
        %1152 = vmatprep.subr.bf16.mxu0 0
        %1153 = vmatpush1.bf16.msra.mxu0 0
        %1154 = vmatprep.subr.bf16.mxu0 0
        %1155 = vmatpush1.bf16.msra.mxu0 0
        %1156 = vmatprep.subr.bf16.mxu0 0
        %1157 = vmatpush1.bf16.msra.mxu0 0
        %1158 = vmatprep.subr.bf16.mxu0 0
        %1159 = vmatpush1.bf16.msra.mxu0 0
        %1160 = vmatprep.subr.bf16.mxu0 0
        %1161 = vmatpush1.bf16.msra.mxu0 0
        %1162 = vmatprep.subr.bf16.mxu0 0
        %1163 = vmatpush1.bf16.msra.mxu0 0
        %1164 = vmatprep.subr.bf16.mxu0 0
        %1165 = vmatpush1.bf16.msra.mxu0 0
        %1166 = vmatprep.subr.bf16.mxu0 0
        %1167 = vmatpush1.bf16.msra.mxu0 0
        %1168 = vmatprep.subr.bf16.mxu0 0
        %1169 = vmatpush1.bf16.msra.mxu0 0
        %1170 = vmatprep.subr.bf16.mxu0 0
        %1171 = vmatpush1.bf16.msra.mxu0 0
        %1172 = vmatprep.subr.bf16.mxu0 0
        %1173 = vmatpush1.bf16.msra.mxu0 0
        %1174 = vmatprep.subr.bf16.mxu0 0
        %1175 = vmatpush1.bf16.msra.mxu0 0
        %1176 = vmatprep.subr.bf16.mxu0 0
        %1177 = vmatpush1.bf16.msra.mxu0 0
        %1178 = vmatprep.subr.bf16.mxu0 0
        %1179 = vmatpush1.bf16.msra.mxu0 0
        %1180 = vmatprep.mubr.bf16.mxu0 0
        %1181 = vmatmul.mubr.bf16.gmra.mrb[0].mxu0 %v1146
        %v1182 = vpop.f32.mrb[0].mxu0
        %v1183 = vadd.f32 0.0, %v1182
        %v1184 = vpop.f32.mrb[0].mxu0
        %v1185 = vpop.f32.mrb[0].mxu0
        %v1186 = vpop.f32.mrb[0].mxu0
        %1187 = vdwg.mxu0
        %v1189 = vsel %vm1120, %v1144, 0
        %1191 = vmatprep.subr.bf16.mxu0 0
        %1192 = vmatpush1.bf16.msra.mxu0 %v1037
        %1193 = vmatprep.subr.bf16.mxu0 0
        %1194 = vmatpush1.bf16.msra.mxu0 0
        %1195 = vmatprep.subr.bf16.mxu0 0
        %1196 = vmatpush1.bf16.msra.mxu0 0
        %1197 = vmatprep.subr.bf16.mxu0 0
        %1198 = vmatpush1.bf16.msra.mxu0 0
        %1199 = vmatprep.subr.bf16.mxu0 0
        %1200 = vmatpush1.bf16.msra.mxu0 0
        %1201 = vmatprep.subr.bf16.mxu0 0
        %1202 = vmatpush1.bf16.msra.mxu0 0
        %1203 = vmatprep.subr.bf16.mxu0 0
        %1204 = vmatpush1.bf16.msra.mxu0 0
        %1205 = vmatprep.subr.bf16.mxu0 0
        %1206 = vmatpush1.bf16.msra.mxu0 0
        %1207 = vmatprep.subr.bf16.mxu0 0
        %1208 = vmatpush1.bf16.msra.mxu0 0
        %1209 = vmatprep.subr.bf16.mxu0 0
        %1210 = vmatpush1.bf16.msra.mxu0 0
        %1211 = vmatprep.subr.bf16.mxu0 0
        %1212 = vmatpush1.bf16.msra.mxu0 0
        %1213 = vmatprep.subr.bf16.mxu0 0
        %1214 = vmatpush1.bf16.msra.mxu0 0
        %1215 = vmatprep.subr.bf16.mxu0 0
        %1216 = vmatpush1.bf16.msra.mxu0 0
        %1217 = vmatprep.subr.bf16.mxu0 0
        %1218 = vmatpush1.bf16.msra.mxu0 0
        %1219 = vmatprep.subr.bf16.mxu0 0
        %1220 = vmatpush1.bf16.msra.mxu0 0
        %1221 = vmatprep.subr.bf16.mxu0 0
        %1222 = vmatpush1.bf16.msra.mxu0 0
        %1223 = vmatprep.mubr.bf16.mxu0 0
        %1224 = vmatmul.mubr.bf16.gmra.mrb[0].mxu0 %v1189
        %v1225 = vpop.f32.mrb[0].mxu0
        %v1226 = vadd.f32 0.0, %v1225
        %v1227 = vpop.f32.mrb[0].mxu0
        %v1228 = vpop.f32.mrb[0].mxu0
        %v1229 = vpop.f32.mrb[0].mxu0
        %1230 = vdwg.mxu0
        %v1231 = vpack.c.bf16 %v1183, %v1183
        %v1232 = vpack.c.bf16 %v1226, %v1226
        %v1233 = vld [vmem:[#allocation11] sm:$0xf]
        %v1234 = vld [vmem:[#allocation11 + $0x4] sm:$0xf]
        %v1235 = vld [vmem:[#allocation11 + $0x8] sm:$0xf]
        %v1236 = vld [vmem:[#allocation11 + $0xc] sm:$0xf]
        %v1237 = vld [vmem:[#allocation11 + $0x10] sm:$0xf]
        %v1238 = vld [vmem:[#allocation11 + $0x14] sm:$0xf]
        %v1239 = vld [vmem:[#allocation11 + $0x18] sm:$0xf]
        %v1240 = vld [vmem:[#allocation11 + $0x1c] sm:$0xf]
        %v1241 = vld [vmem:[#allocation11 + $0x20] sm:$0xf]
        %v1242 = vld [vmem:[#allocation11 + $0x24] sm:$0xf]
        %v1243 = vld [vmem:[#allocation11 + $0x28] sm:$0xf]
        %v1244 = vld [vmem:[#allocation11 + $0x2c] sm:$0xf]
        %v1245 = vld [vmem:[#allocation11 + $0x30] sm:$0xf]
        %v1246 = vld [vmem:[#allocation11 + $0x34] sm:$0xf]
        %v1247 = vld [vmem:[#allocation11 + $0x38] sm:$0xf]
        %v1248 = vld [vmem:[#allocation11 + $0x3c] sm:$0xf]
        %v1249 = vld [vmem:[#allocation11 + $0x40] sm:$0xf]
        %v1250 = vld [vmem:[#allocation11 + $0x44] sm:$0xf]
        %v1251 = vld [vmem:[#allocation11 + $0x48] sm:$0xf]
        %v1252 = vld [vmem:[#allocation11 + $0x4c] sm:$0xf]
        %v1253 = vld [vmem:[#allocation11 + $0x50] sm:$0xf]
        %v1254 = vld [vmem:[#allocation11 + $0x54] sm:$0xf]
        %v1255 = vld [vmem:[#allocation11 + $0x58] sm:$0xf]
        %v1256 = vld [vmem:[#allocation11 + $0x5c] sm:$0xf]
        %v1257 = vld [vmem:[#allocation11 + $0x60] sm:$0xf]
        %v1258 = vld [vmem:[#allocation11 + $0x64] sm:$0xf]
        %v1259 = vld [vmem:[#allocation11 + $0x68] sm:$0xf]
        %v1260 = vld [vmem:[#allocation11 + $0x6c] sm:$0xf]
        %v1261 = vld [vmem:[#allocation11 + $0x70] sm:$0xf]
        %v1262 = vld [vmem:[#allocation11 + $0x74] sm:$0xf]
        %v1263 = vld [vmem:[#allocation11 + $0x78] sm:$0xf]
        %v1264 = vld [vmem:[#allocation11 + $0x7c] sm:$0xf]
        %v1281 = vunpack.c.l.b16 %v1233
        %v1282 = vunpack.c.l.b16 %v1234
        %v1283 = vunpack.c.l.b16 %v1235
        %v1284 = vunpack.c.l.b16 %v1236
        %v1285 = vunpack.c.l.b16 %v1237
        %v1286 = vunpack.c.l.b16 %v1238
        %v1287 = vunpack.c.l.b16 %v1239
        %v1288 = vunpack.c.l.b16 %v1240
        %v1289 = vunpack.c.l.b16 %v1241
        %v1290 = vunpack.c.l.b16 %v1242
        %v1291 = vunpack.c.l.b16 %v1243
        %v1292 = vunpack.c.l.b16 %v1244
        %v1293 = vunpack.c.l.b16 %v1245
        %v1294 = vunpack.c.l.b16 %v1246
        %v1295 = vunpack.c.l.b16 %v1247
        %v1296 = vunpack.c.l.b16 %v1248
        %v1297 = vpack.c.b16 %v1282, %v1281
        %v1298 = vpack.c.b16 %v1284, %v1283
        %v1299 = vpack.c.b16 %v1286, %v1285
        %v1300 = vpack.c.b16 %v1288, %v1287
        %v1301 = vpack.c.b16 %v1290, %v1289
        %v1302 = vpack.c.b16 %v1292, %v1291
        %v1303 = vpack.c.b16 %v1294, %v1293
        %v1304 = vpack.c.b16 %v1296, %v1295
        %1313 = vmatprep.subr.bf16.mxu0 0
        %1314 = vmatpush1.bf16.msra.mxu0 %v1297
        %1315 = vmatprep.subr.bf16.mxu0 0
        %1316 = vmatpush1.bf16.msra.mxu0 %v1298
        %1317 = vmatprep.subr.bf16.mxu0 0
        %1318 = vmatpush1.bf16.msra.mxu0 %v1299
        %1319 = vmatprep.subr.bf16.mxu0 0
        %1320 = vmatpush1.bf16.msra.mxu0 %v1300
        %1321 = vmatprep.subr.bf16.mxu0 0
        %1322 = vmatpush1.bf16.msra.mxu0 %v1301
        %1323 = vmatprep.subr.bf16.mxu0 0
        %1324 = vmatpush1.bf16.msra.mxu0 %v1302
        %1325 = vmatprep.subr.bf16.mxu0 0
        %1326 = vmatpush1.bf16.msra.mxu0 %v1303
        %1327 = vmatprep.subr.bf16.mxu0 0
        %1328 = vmatpush1.bf16.msra.mxu0 %v1304
        %1329 = vmatprep.subr.bf16.mxu0 0
        %1330 = vmatpush1.bf16.msra.mxu0 0
        %1331 = vmatprep.subr.bf16.mxu0 0
        %1332 = vmatpush1.bf16.msra.mxu0 0
        %1333 = vmatprep.subr.bf16.mxu0 0
        %1334 = vmatpush1.bf16.msra.mxu0 0
        %1335 = vmatprep.subr.bf16.mxu0 0
        %1336 = vmatpush1.bf16.msra.mxu0 0
        %1337 = vmatprep.subr.bf16.mxu0 0
        %1338 = vmatpush1.bf16.msra.mxu0 0
        %1339 = vmatprep.subr.bf16.mxu0 0
        %1340 = vmatpush1.bf16.msra.mxu0 0
        %1341 = vmatprep.subr.bf16.mxu0 0
        %1342 = vmatpush1.bf16.msra.mxu0 0
        %1343 = vmatprep.subr.bf16.mxu0 0
        %1344 = vmatpush1.bf16.msra.mxu0 0
        %1345 = vmatprep.mubr.bf16.mxu0 0
        %1346 = vmatmul.mubr.bf16.gmra.mrb[0].mxu0 %v1231
        %v1347 = vpop.f32.mrb[0].mxu0
        %v1348 = vadd.f32 0.0, %v1347
        %v1349 = vpop.f32.mrb[0].mxu0
        %v1350 = vpop.f32.mrb[0].mxu0
        %v1351 = vpop.f32.mrb[0].mxu0
        %1352 = vdwg.mxu0
        %v1369 = vunpack.c.l.b16 %v1249
        %v1370 = vunpack.c.l.b16 %v1250
        %v1371 = vunpack.c.l.b16 %v1251
        %v1372 = vunpack.c.l.b16 %v1252
        %v1373 = vunpack.c.l.b16 %v1253
        %v1374 = vunpack.c.l.b16 %v1254
        %v1375 = vunpack.c.l.b16 %v1255
        %v1376 = vunpack.c.l.b16 %v1256
        %v1377 = vunpack.c.l.b16 %v1257
        %v1378 = vunpack.c.l.b16 %v1258
        %v1379 = vunpack.c.l.b16 %v1259
        %v1380 = vunpack.c.l.b16 %v1260
        %v1381 = vunpack.c.l.b16 %v1261
        %v1382 = vunpack.c.l.b16 %v1262
        %v1383 = vunpack.c.l.b16 %v1263
        %v1384 = vunpack.c.l.b16 %v1264
        %v1385 = vpack.c.b16 %v1370, %v1369
        %v1386 = vpack.c.b16 %v1372, %v1371
        %v1387 = vpack.c.b16 %v1374, %v1373
        %v1388 = vpack.c.b16 %v1376, %v1375
        %v1389 = vpack.c.b16 %v1378, %v1377
        %v1390 = vpack.c.b16 %v1380, %v1379
        %v1391 = vpack.c.b16 %v1382, %v1381
        %v1392 = vpack.c.b16 %v1384, %v1383
        %1401 = vmatprep.subr.bf16.mxu0 0
        %1402 = vmatpush1.bf16.msra.mxu0 %v1385
        %1403 = vmatprep.subr.bf16.mxu0 0
        %1404 = vmatpush1.bf16.msra.mxu0 %v1386
        %1405 = vmatprep.subr.bf16.mxu0 0
        %1406 = vmatpush1.bf16.msra.mxu0 %v1387
        %1407 = vmatprep.subr.bf16.mxu0 0
        %1408 = vmatpush1.bf16.msra.mxu0 %v1388
        %1409 = vmatprep.subr.bf16.mxu0 0
        %1410 = vmatpush1.bf16.msra.mxu0 %v1389
        %1411 = vmatprep.subr.bf16.mxu0 0
        %1412 = vmatpush1.bf16.msra.mxu0 %v1390
        %1413 = vmatprep.subr.bf16.mxu0 0
        %1414 = vmatpush1.bf16.msra.mxu0 %v1391
        %1415 = vmatprep.subr.bf16.mxu0 0
        %1416 = vmatpush1.bf16.msra.mxu0 %v1392
        %1417 = vmatprep.subr.bf16.mxu0 0
        %1418 = vmatpush1.bf16.msra.mxu0 0
        %1419 = vmatprep.subr.bf16.mxu0 0
        %1420 = vmatpush1.bf16.msra.mxu0 0
        %1421 = vmatprep.subr.bf16.mxu0 0
        %1422 = vmatpush1.bf16.msra.mxu0 0
        %1423 = vmatprep.subr.bf16.mxu0 0
        %1424 = vmatpush1.bf16.msra.mxu0 0
        %1425 = vmatprep.subr.bf16.mxu0 0
        %1426 = vmatpush1.bf16.msra.mxu0 0
        %1427 = vmatprep.subr.bf16.mxu0 0
        %1428 = vmatpush1.bf16.msra.mxu0 0
        %1429 = vmatprep.subr.bf16.mxu0 0
        %1430 = vmatpush1.bf16.msra.mxu0 0
        %1431 = vmatprep.subr.bf16.mxu0 0
        %1432 = vmatpush1.bf16.msra.mxu0 0
        %1433 = vmatprep.mubr.bf16.mxu0 0
        %1434 = vmatmul.mubr.bf16.gmra.mrb[0].mxu0 %v1232
        %v1435 = vpop.f32.mrb[0].mxu0
        %v1436 = vadd.f32 0.0, %v1435
        %v1437 = vpop.f32.mrb[0].mxu0
        %v1438 = vpop.f32.mrb[0].mxu0
        %v1439 = vpop.f32.mrb[0].mxu0
        %1440 = vdwg.mxu0
        %v1441 = vadd.f32 %v1348, %v1436
        %v1442 = vld [vmem:[#allocation13] sm:$0xff]
        %v1443 = vld [vmem:[#allocation13 + $0x8] sm:$0xff]
        %v1444 = vld [vmem:[#allocation13 + $0x10] sm:$0xff]
        %v1445 = vld [vmem:[#allocation13 + $0x18] sm:$0xff]
        %v1446 = vld [vmem:[#allocation13 + $0x20] sm:$0xff]
        %v1447 = vld [vmem:[#allocation13 + $0x28] sm:$0xff]
        %v1448 = vld [vmem:[#allocation13 + $0x30] sm:$0xff]
        %v1449 = vld [vmem:[#allocation13 + $0x38] sm:$0xff]
        %v1450 = vld [vmem:[#allocation13 + $0x40] sm:$0xff]
        %v1451 = vld [vmem:[#allocation13 + $0x48] sm:$0xff]
        %v1452 = vld [vmem:[#allocation13 + $0x50] sm:$0xff]
        %v1453 = vld [vmem:[#allocation13 + $0x58] sm:$0xff]
        %v1454 = vld [vmem:[#allocation13 + $0x60] sm:$0xff]
        %v1455 = vld [vmem:[#allocation13 + $0x68] sm:$0xff]
        %v1456 = vld [vmem:[#allocation13 + $0x70] sm:$0xff]
        %v1457 = vld [vmem:[#allocation13 + $0x78] sm:$0xff]
        %v1458 = vld [vmem:[#allocation13 + $0x80] sm:$0xff]
        %v1459 = vld [vmem:[#allocation13 + $0x88] sm:$0xff]
        %v1460 = vld [vmem:[#allocation13 + $0x90] sm:$0xff]
        %v1461 = vld [vmem:[#allocation13 + $0x98] sm:$0xff]
        %v1462 = vld [vmem:[#allocation13 + $0xa0] sm:$0xff]
        %v1463 = vld [vmem:[#allocation13 + $0xa8] sm:$0xff]
        %v1464 = vld [vmem:[#allocation13 + $0xb0] sm:$0xff]
        %v1465 = vld [vmem:[#allocation13 + $0xb8] sm:$0xff]
        %v1466 = vld [vmem:[#allocation13 + $0xc0] sm:$0xff]
        %v1467 = vld [vmem:[#allocation13 + $0xc8] sm:$0xff]
        %v1468 = vld [vmem:[#allocation13 + $0xd0] sm:$0xff]
        %v1469 = vld [vmem:[#allocation13 + $0xd8] sm:$0xff]
        %v1470 = vld [vmem:[#allocation13 + $0xe0] sm:$0xff]
        %v1471 = vld [vmem:[#allocation13 + $0xe8] sm:$0xff]
        %v1472 = vld [vmem:[#allocation13 + $0xf0] sm:$0xff]
        %v1473 = vld [vmem:[#allocation13 + $0xf8] sm:$0xff]
        %v1506 = vunpack.c.l.b16 %v1442
        %v1507 = vunpack.c.h.b16 %v1442
        %v1508 = vunpack.c.l.b16 %v1443
        %v1509 = vunpack.c.h.b16 %v1443
        %v1510 = vunpack.c.l.b16 %v1444
        %v1511 = vunpack.c.h.b16 %v1444
        %v1512 = vunpack.c.l.b16 %v1445
        %v1513 = vunpack.c.h.b16 %v1445
        %v1514 = vunpack.c.l.b16 %v1446
        %v1515 = vunpack.c.h.b16 %v1446
        %v1516 = vunpack.c.l.b16 %v1447
        %v1517 = vunpack.c.h.b16 %v1447
        %v1518 = vunpack.c.l.b16 %v1448
        %v1519 = vunpack.c.h.b16 %v1448
        %v1520 = vunpack.c.l.b16 %v1449
        %v1521 = vunpack.c.h.b16 %v1449
        %v1522 = vunpack.c.l.b16 %v1450
        %v1523 = vunpack.c.h.b16 %v1450
        %v1524 = vunpack.c.l.b16 %v1451
        %v1525 = vunpack.c.h.b16 %v1451
        %v1526 = vunpack.c.l.b16 %v1452
        %v1527 = vunpack.c.h.b16 %v1452
        %v1528 = vunpack.c.l.b16 %v1453
        %v1529 = vunpack.c.h.b16 %v1453
        %v1530 = vunpack.c.l.b16 %v1454
        %v1531 = vunpack.c.h.b16 %v1454
        %v1532 = vunpack.c.l.b16 %v1455
        %v1533 = vunpack.c.h.b16 %v1455
        %v1534 = vunpack.c.l.b16 %v1456
        %v1535 = vunpack.c.h.b16 %v1456
        %v1536 = vunpack.c.l.b16 %v1457
        %v1537 = vunpack.c.h.b16 %v1457
        %v1538 = vunpack.c.l.b16 %v1458
        %v1539 = vunpack.c.h.b16 %v1458
        %v1540 = vunpack.c.l.b16 %v1459
        %v1541 = vunpack.c.h.b16 %v1459
        %v1542 = vunpack.c.l.b16 %v1460
        %v1543 = vunpack.c.h.b16 %v1460
        %v1544 = vunpack.c.l.b16 %v1461
        %v1545 = vunpack.c.h.b16 %v1461
        %v1546 = vunpack.c.l.b16 %v1462
        %v1547 = vunpack.c.h.b16 %v1462
        %v1548 = vunpack.c.l.b16 %v1463
        %v1549 = vunpack.c.h.b16 %v1463
        %v1550 = vunpack.c.l.b16 %v1464
        %v1551 = vunpack.c.h.b16 %v1464
        %v1552 = vunpack.c.l.b16 %v1465
        %v1553 = vunpack.c.h.b16 %v1465
        %v1554 = vunpack.c.l.b16 %v1466
        %v1555 = vunpack.c.h.b16 %v1466
        %v1556 = vunpack.c.l.b16 %v1467
        %v1557 = vunpack.c.h.b16 %v1467
        %v1558 = vunpack.c.l.b16 %v1468
        %v1559 = vunpack.c.h.b16 %v1468
        %v1560 = vunpack.c.l.b16 %v1469
        %v1561 = vunpack.c.h.b16 %v1469
        %v1562 = vunpack.c.l.b16 %v1470
        %v1563 = vunpack.c.h.b16 %v1470
        %v1564 = vunpack.c.l.b16 %v1471
        %v1565 = vunpack.c.h.b16 %v1471
        %v1566 = vunpack.c.l.b16 %v1472
        %v1567 = vunpack.c.h.b16 %v1472
        %v1568 = vunpack.c.l.b16 %v1473
        %v1569 = vunpack.c.h.b16 %v1473
        %v1570 = vpack.c.b16 %v1510, %v1506
        %v1571 = vpack.c.b16 %v1511, %v1507
        %v1572 = vpack.c.b16 %v1512, %v1508
        %v1573 = vpack.c.b16 %v1513, %v1509
        %v1574 = vpack.c.b16 %v1518, %v1514
        %v1575 = vpack.c.b16 %v1519, %v1515
        %v1576 = vpack.c.b16 %v1520, %v1516
        %v1577 = vpack.c.b16 %v1521, %v1517
        %v1578 = vpack.c.b16 %v1526, %v1522
        %v1579 = vpack.c.b16 %v1527, %v1523
        %v1580 = vpack.c.b16 %v1528, %v1524
        %v1581 = vpack.c.b16 %v1529, %v1525
        %v1582 = vpack.c.b16 %v1534, %v1530
        %v1583 = vpack.c.b16 %v1535, %v1531
        %v1584 = vpack.c.b16 %v1536, %v1532
        %v1585 = vpack.c.b16 %v1537, %v1533
        %v1586 = vpack.c.b16 %v1542, %v1538
        %v1587 = vpack.c.b16 %v1543, %v1539
        %v1588 = vpack.c.b16 %v1544, %v1540
        %v1589 = vpack.c.b16 %v1545, %v1541
        %v1590 = vpack.c.b16 %v1550, %v1546
        %v1591 = vpack.c.b16 %v1551, %v1547
        %v1592 = vpack.c.b16 %v1552, %v1548
        %v1593 = vpack.c.b16 %v1553, %v1549
        %v1594 = vpack.c.b16 %v1558, %v1554
        %v1595 = vpack.c.b16 %v1559, %v1555
        %v1596 = vpack.c.b16 %v1560, %v1556
        %v1597 = vpack.c.b16 %v1561, %v1557
        %v1598 = vpack.c.b16 %v1566, %v1562
        %v1599 = vpack.c.b16 %v1567, %v1563
        %v1600 = vpack.c.b16 %v1568, %v1564
        %v1601 = vpack.c.b16 %v1569, %v1565
        %1634 = vmatprep.subr.bf16.mxu0 %v1571
        %1635 = vmatpush1.bf16.msra.mxu0 %v1570
        %1636 = vmatprep.subr.bf16.mxu0 %v1575
        %1637 = vmatpush1.bf16.msra.mxu0 %v1574
        %1638 = vmatprep.subr.bf16.mxu0 %v1579
        %1639 = vmatpush1.bf16.msra.mxu0 %v1578
        %1640 = vmatprep.subr.bf16.mxu0 %v1583
        %1641 = vmatpush1.bf16.msra.mxu0 %v1582
        %1642 = vmatprep.subr.bf16.mxu0 %v1587
        %1643 = vmatpush1.bf16.msra.mxu0 %v1586
        %1644 = vmatprep.subr.bf16.mxu0 %v1591
        %1645 = vmatpush1.bf16.msra.mxu0 %v1590
        %1646 = vmatprep.subr.bf16.mxu0 %v1595
        %1647 = vmatpush1.bf16.msra.mxu0 %v1594
        %1648 = vmatprep.subr.bf16.mxu0 %v1599
        %1649 = vmatpush1.bf16.msra.mxu0 %v1598
        %1650 = vmatprep.subr.bf16.mxu0 0
        %1651 = vmatpush1.bf16.msra.mxu0 0
        %1652 = vmatprep.subr.bf16.mxu0 0
        %1653 = vmatpush1.bf16.msra.mxu0 0
        %1654 = vmatprep.subr.bf16.mxu0 0
        %1655 = vmatpush1.bf16.msra.mxu0 0
        %1656 = vmatprep.subr.bf16.mxu0 0
        %1657 = vmatpush1.bf16.msra.mxu0 0
        %1658 = vmatprep.subr.bf16.mxu0 0
        %1659 = vmatpush1.bf16.msra.mxu0 0
        %1660 = vmatprep.subr.bf16.mxu0 0
        %1661 = vmatpush1.bf16.msra.mxu0 0
        %1662 = vmatprep.subr.bf16.mxu0 0
        %1663 = vmatpush1.bf16.msra.mxu0 0
        %1664 = vmatprep.subr.bf16.mxu0 0
        %1665 = vmatpush1.bf16.msra.mxu0 0
        %1666 = vmatprep.mubr.bf16.mxu0 0
        %1667 = vmatmul.mubr.bf16.gmra.mrb[0].mxu0 %v616
        %v1668 = vpop.f32.mrb[0].mxu0
        %v1669 = vadd.f32 0.0, %v1668
        %v1670 = vpop.f32.mrb[0].mxu0
        %v1671 = vadd.f32 0.0, %v1670
        %v1672 = vpop.f32.mrb[0].mxu0
        %v1673 = vpop.f32.mrb[0].mxu0
        %1674 = vdwg.mxu0
        %1675 = vmatprep.subr.bf16.mxu0 %v1573
        %1676 = vmatpush1.bf16.msra.mxu0 %v1572
        %1677 = vmatprep.subr.bf16.mxu0 %v1577
        %1678 = vmatpush1.bf16.msra.mxu0 %v1576
        %1679 = vmatprep.subr.bf16.mxu0 %v1581
        %1680 = vmatpush1.bf16.msra.mxu0 %v1580
        %1681 = vmatprep.subr.bf16.mxu0 %v1585
        %1682 = vmatpush1.bf16.msra.mxu0 %v1584
        %1683 = vmatprep.subr.bf16.mxu0 %v1589
        %1684 = vmatpush1.bf16.msra.mxu0 %v1588
        %1685 = vmatprep.subr.bf16.mxu0 %v1593
        %1686 = vmatpush1.bf16.msra.mxu0 %v1592
        %1687 = vmatprep.subr.bf16.mxu0 %v1597
        %1688 = vmatpush1.bf16.msra.mxu0 %v1596
        %1689 = vmatprep.subr.bf16.mxu0 %v1601
        %1690 = vmatpush1.bf16.msra.mxu0 %v1600
        %1691 = vmatprep.subr.bf16.mxu0 0
        %1692 = vmatpush1.bf16.msra.mxu0 0
        %1693 = vmatprep.subr.bf16.mxu0 0
        %1694 = vmatpush1.bf16.msra.mxu0 0
        %1695 = vmatprep.subr.bf16.mxu0 0
        %1696 = vmatpush1.bf16.msra.mxu0 0
        %1697 = vmatprep.subr.bf16.mxu0 0
        %1698 = vmatpush1.bf16.msra.mxu0 0
        %1699 = vmatprep.subr.bf16.mxu0 0
        %1700 = vmatpush1.bf16.msra.mxu0 0
        %1701 = vmatprep.subr.bf16.mxu0 0
        %1702 = vmatpush1.bf16.msra.mxu0 0
        %1703 = vmatprep.subr.bf16.mxu0 0
        %1704 = vmatpush1.bf16.msra.mxu0 0
        %1705 = vmatprep.subr.bf16.mxu0 0
        %1706 = vmatpush1.bf16.msra.mxu0 0
        %1707 = vmatprep.mubr.bf16.mxu0 0
        %1708 = vmatmul.mubr.bf16.gmra.mrb[0].mxu0 %v616
        %v1709 = vpop.f32.mrb[0].mxu0
        %v1710 = vadd.f32 0.0, %v1709
        %v1711 = vpop.f32.mrb[0].mxu0
        %v1712 = vadd.f32 0.0, %v1711
        %v1713 = vpop.f32.mrb[0].mxu0
        %v1714 = vpop.f32.mrb[0].mxu0
        %1715 = vdwg.mxu0
        %v1716 = vld [vmem:[#allocation14] sm:$0xff]
        %v1717 = vld [vmem:[#allocation14 + $0x8] sm:$0xff]
        %v1718 = vld [vmem:[#allocation14 + $0x10] sm:$0xff]
        %v1719 = vld [vmem:[#allocation14 + $0x18] sm:$0xff]
        %v1720 = vld [vmem:[#allocation14 + $0x20] sm:$0xff]
        %v1721 = vld [vmem:[#allocation14 + $0x28] sm:$0xff]
        %v1722 = vld [vmem:[#allocation14 + $0x30] sm:$0xff]
        %v1723 = vld [vmem:[#allocation14 + $0x38] sm:$0xff]
        %v1724 = vld [vmem:[#allocation14 + $0x40] sm:$0xff]
        %v1725 = vld [vmem:[#allocation14 + $0x48] sm:$0xff]
        %v1726 = vld [vmem:[#allocation14 + $0x50] sm:$0xff]
        %v1727 = vld [vmem:[#allocation14 + $0x58] sm:$0xff]
        %v1728 = vld [vmem:[#allocation14 + $0x60] sm:$0xff]
        %v1729 = vld [vmem:[#allocation14 + $0x68] sm:$0xff]
        %v1730 = vld [vmem:[#allocation14 + $0x70] sm:$0xff]
        %v1731 = vld [vmem:[#allocation14 + $0x78] sm:$0xff]
        %v1732 = vld [vmem:[#allocation14 + $0x80] sm:$0xff]
        %v1733 = vld [vmem:[#allocation14 + $0x88] sm:$0xff]
        %v1734 = vld [vmem:[#allocation14 + $0x90] sm:$0xff]
        %v1735 = vld [vmem:[#allocation14 + $0x98] sm:$0xff]
        %v1736 = vld [vmem:[#allocation14 + $0xa0] sm:$0xff]
        %v1737 = vld [vmem:[#allocation14 + $0xa8] sm:$0xff]
        %v1738 = vld [vmem:[#allocation14 + $0xb0] sm:$0xff]
        %v1739 = vld [vmem:[#allocation14 + $0xb8] sm:$0xff]
        %v1740 = vld [vmem:[#allocation14 + $0xc0] sm:$0xff]
        %v1741 = vld [vmem:[#allocation14 + $0xc8] sm:$0xff]
        %v1742 = vld [vmem:[#allocation14 + $0xd0] sm:$0xff]
        %v1743 = vld [vmem:[#allocation14 + $0xd8] sm:$0xff]
        %v1744 = vld [vmem:[#allocation14 + $0xe0] sm:$0xff]
        %v1745 = vld [vmem:[#allocation14 + $0xe8] sm:$0xff]
        %v1746 = vld [vmem:[#allocation14 + $0xf0] sm:$0xff]
        %v1747 = vld [vmem:[#allocation14 + $0xf8] sm:$0xff]
        %v1780 = vunpack.c.l.b16 %v1716
        %v1781 = vunpack.c.h.b16 %v1716
        %v1782 = vunpack.c.l.b16 %v1717
        %v1783 = vunpack.c.h.b16 %v1717
        %v1784 = vunpack.c.l.b16 %v1718
        %v1785 = vunpack.c.h.b16 %v1718
        %v1786 = vunpack.c.l.b16 %v1719
        %v1787 = vunpack.c.h.b16 %v1719
        %v1788 = vunpack.c.l.b16 %v1720
        %v1789 = vunpack.c.h.b16 %v1720
        %v1790 = vunpack.c.l.b16 %v1721
        %v1791 = vunpack.c.h.b16 %v1721
        %v1792 = vunpack.c.l.b16 %v1722
        %v1793 = vunpack.c.h.b16 %v1722
        %v1794 = vunpack.c.l.b16 %v1723
        %v1795 = vunpack.c.h.b16 %v1723
        %v1796 = vunpack.c.l.b16 %v1724
        %v1797 = vunpack.c.h.b16 %v1724
        %v1798 = vunpack.c.l.b16 %v1725
        %v1799 = vunpack.c.h.b16 %v1725
        %v1800 = vunpack.c.l.b16 %v1726
        %v1801 = vunpack.c.h.b16 %v1726
        %v1802 = vunpack.c.l.b16 %v1727
        %v1803 = vunpack.c.h.b16 %v1727
        %v1804 = vunpack.c.l.b16 %v1728
        %v1805 = vunpack.c.h.b16 %v1728
        %v1806 = vunpack.c.l.b16 %v1729
        %v1807 = vunpack.c.h.b16 %v1729
        %v1808 = vunpack.c.l.b16 %v1730
        %v1809 = vunpack.c.h.b16 %v1730
        %v1810 = vunpack.c.l.b16 %v1731
        %v1811 = vunpack.c.h.b16 %v1731
        %v1812 = vunpack.c.l.b16 %v1732
        %v1813 = vunpack.c.h.b16 %v1732
        %v1814 = vunpack.c.l.b16 %v1733
        %v1815 = vunpack.c.h.b16 %v1733
        %v1816 = vunpack.c.l.b16 %v1734
        %v1817 = vunpack.c.h.b16 %v1734
        %v1818 = vunpack.c.l.b16 %v1735
        %v1819 = vunpack.c.h.b16 %v1735
        %v1820 = vunpack.c.l.b16 %v1736
        %v1821 = vunpack.c.h.b16 %v1736
        %v1822 = vunpack.c.l.b16 %v1737
        %v1823 = vunpack.c.h.b16 %v1737
        %v1824 = vunpack.c.l.b16 %v1738
        %v1825 = vunpack.c.h.b16 %v1738
        %v1826 = vunpack.c.l.b16 %v1739
        %v1827 = vunpack.c.h.b16 %v1739
        %v1828 = vunpack.c.l.b16 %v1740
        %v1829 = vunpack.c.h.b16 %v1740
        %v1830 = vunpack.c.l.b16 %v1741
        %v1831 = vunpack.c.h.b16 %v1741
        %v1832 = vunpack.c.l.b16 %v1742
        %v1833 = vunpack.c.h.b16 %v1742
        %v1834 = vunpack.c.l.b16 %v1743
        %v1835 = vunpack.c.h.b16 %v1743
        %v1836 = vunpack.c.l.b16 %v1744
        %v1837 = vunpack.c.h.b16 %v1744
        %v1838 = vunpack.c.l.b16 %v1745
        %v1839 = vunpack.c.h.b16 %v1745
        %v1840 = vunpack.c.l.b16 %v1746
        %v1841 = vunpack.c.h.b16 %v1746
        %v1842 = vunpack.c.l.b16 %v1747
        %v1843 = vunpack.c.h.b16 %v1747
        %v1844 = vpack.c.b16 %v1784, %v1780
        %v1845 = vpack.c.b16 %v1785, %v1781
        %v1846 = vpack.c.b16 %v1786, %v1782
        %v1847 = vpack.c.b16 %v1787, %v1783
        %v1848 = vpack.c.b16 %v1792, %v1788
        %v1849 = vpack.c.b16 %v1793, %v1789
        %v1850 = vpack.c.b16 %v1794, %v1790
        %v1851 = vpack.c.b16 %v1795, %v1791
        %v1852 = vpack.c.b16 %v1800, %v1796
        %v1853 = vpack.c.b16 %v1801, %v1797
        %v1854 = vpack.c.b16 %v1802, %v1798
        %v1855 = vpack.c.b16 %v1803, %v1799
        %v1856 = vpack.c.b16 %v1808, %v1804
        %v1857 = vpack.c.b16 %v1809, %v1805
        %v1858 = vpack.c.b16 %v1810, %v1806
        %v1859 = vpack.c.b16 %v1811, %v1807
        %v1860 = vpack.c.b16 %v1816, %v1812
        %v1861 = vpack.c.b16 %v1817, %v1813
        %v1862 = vpack.c.b16 %v1818, %v1814
        %v1863 = vpack.c.b16 %v1819, %v1815
        %v1864 = vpack.c.b16 %v1824, %v1820
        %v1865 = vpack.c.b16 %v1825, %v1821
        %v1866 = vpack.c.b16 %v1826, %v1822
        %v1867 = vpack.c.b16 %v1827, %v1823
        %v1868 = vpack.c.b16 %v1832, %v1828
        %v1869 = vpack.c.b16 %v1833, %v1829
        %v1870 = vpack.c.b16 %v1834, %v1830
        %v1871 = vpack.c.b16 %v1835, %v1831
        %v1872 = vpack.c.b16 %v1840, %v1836
        %v1873 = vpack.c.b16 %v1841, %v1837
        %v1874 = vpack.c.b16 %v1842, %v1838
        %v1875 = vpack.c.b16 %v1843, %v1839
        %1908 = vmatprep.subr.bf16.mxu0 %v1845
        %1909 = vmatpush1.bf16.msra.mxu0 %v1844
        %1910 = vmatprep.subr.bf16.mxu0 %v1849
        %1911 = vmatpush1.bf16.msra.mxu0 %v1848
        %1912 = vmatprep.subr.bf16.mxu0 %v1853
        %1913 = vmatpush1.bf16.msra.mxu0 %v1852
        %1914 = vmatprep.subr.bf16.mxu0 %v1857
        %1915 = vmatpush1.bf16.msra.mxu0 %v1856
        %1916 = vmatprep.subr.bf16.mxu0 %v1861
        %1917 = vmatpush1.bf16.msra.mxu0 %v1860
        %1918 = vmatprep.subr.bf16.mxu0 %v1865
        %1919 = vmatpush1.bf16.msra.mxu0 %v1864
        %1920 = vmatprep.subr.bf16.mxu0 %v1869
        %1921 = vmatpush1.bf16.msra.mxu0 %v1868
        %1922 = vmatprep.subr.bf16.mxu0 %v1873
        %1923 = vmatpush1.bf16.msra.mxu0 %v1872
        %1924 = vmatprep.subr.bf16.mxu0 0
        %1925 = vmatpush1.bf16.msra.mxu0 0
        %1926 = vmatprep.subr.bf16.mxu0 0
        %1927 = vmatpush1.bf16.msra.mxu0 0
        %1928 = vmatprep.subr.bf16.mxu0 0
        %1929 = vmatpush1.bf16.msra.mxu0 0
        %1930 = vmatprep.subr.bf16.mxu0 0
        %1931 = vmatpush1.bf16.msra.mxu0 0
        %1932 = vmatprep.subr.bf16.mxu0 0
        %1933 = vmatpush1.bf16.msra.mxu0 0
        %1934 = vmatprep.subr.bf16.mxu0 0
        %1935 = vmatpush1.bf16.msra.mxu0 0
        %1936 = vmatprep.subr.bf16.mxu0 0
        %1937 = vmatpush1.bf16.msra.mxu0 0
        %1938 = vmatprep.subr.bf16.mxu0 0
        %1939 = vmatpush1.bf16.msra.mxu0 0
        %1940 = vmatprep.mubr.bf16.mxu0 0
        %1941 = vmatmul.mubr.bf16.gmra.mrb[0].mxu0 %v616
        %v1942 = vpop.f32.mrb[0].mxu0
        %v1943 = vadd.f32 0.0, %v1942
        %v1944 = vpop.f32.mrb[0].mxu0
        %v1945 = vadd.f32 0.0, %v1944
        %v1946 = vpop.f32.mrb[0].mxu0
        %v1947 = vpop.f32.mrb[0].mxu0
        %1948 = vdwg.mxu0
        %1949 = vmatprep.subr.bf16.mxu0 %v1847
        %1950 = vmatpush1.bf16.msra.mxu0 %v1846
        %1951 = vmatprep.subr.bf16.mxu0 %v1851
        %1952 = vmatpush1.bf16.msra.mxu0 %v1850
        %1953 = vmatprep.subr.bf16.mxu0 %v1855
        %1954 = vmatpush1.bf16.msra.mxu0 %v1854
        %1955 = vmatprep.subr.bf16.mxu0 %v1859
        %1956 = vmatpush1.bf16.msra.mxu0 %v1858
        %1957 = vmatprep.subr.bf16.mxu0 %v1863
        %1958 = vmatpush1.bf16.msra.mxu0 %v1862
        %1959 = vmatprep.subr.bf16.mxu0 %v1867
        %1960 = vmatpush1.bf16.msra.mxu0 %v1866
        %1961 = vmatprep.subr.bf16.mxu0 %v1871
        %1962 = vmatpush1.bf16.msra.mxu0 %v1870
        %1963 = vmatprep.subr.bf16.mxu0 %v1875
        %1964 = vmatpush1.bf16.msra.mxu0 %v1874
        %1965 = vmatprep.subr.bf16.mxu0 0
        %1966 = vmatpush1.bf16.msra.mxu0 0
        %1967 = vmatprep.subr.bf16.mxu0 0
        %1968 = vmatpush1.bf16.msra.mxu0 0
        %1969 = vmatprep.subr.bf16.mxu0 0
        %1970 = vmatpush1.bf16.msra.mxu0 0
        %1971 = vmatprep.subr.bf16.mxu0 0
        %1972 = vmatpush1.bf16.msra.mxu0 0
        %1973 = vmatprep.subr.bf16.mxu0 0
        %1974 = vmatpush1.bf16.msra.mxu0 0
        %1975 = vmatprep.subr.bf16.mxu0 0
        %1976 = vmatpush1.bf16.msra.mxu0 0
        %1977 = vmatprep.subr.bf16.mxu0 0
        %1978 = vmatpush1.bf16.msra.mxu0 0
        %1979 = vmatprep.subr.bf16.mxu0 0
        %1980 = vmatpush1.bf16.msra.mxu0 0
        %1981 = vmatprep.mubr.bf16.mxu0 0
        %1982 = vmatmul.mubr.bf16.gmra.mrb[0].mxu0 %v616
        %v1983 = vpop.f32.mrb[0].mxu0
        %v1984 = vadd.f32 0.0, %v1983
        %v1985 = vpop.f32.mrb[0].mxu0
        %v1986 = vadd.f32 0.0, %v1985
        %v1987 = vpop.f32.mrb[0].mxu0
        %v1988 = vpop.f32.mrb[0].mxu0
        %1989 = vdwg.mxu0
        %v1990 = vxor.u32 %v1943, 2147483648
        %v1991 = vxor.u32 %v1945, 2147483648
        %v1992 = vxor.u32 %v1984, 2147483648
        %v1993 = vxor.u32 %v1986, 2147483648
        %v1994 = vmul.f32 %v1990, 1.442695
        %v1995 = vpow.pop %v1994
        %v1996 = vmul.f32 %v1991, 1.442695
        %v1997 = vpow.pop %v1996
        %v1998 = vmul.f32 %v1992, 1.442695
        %v1999 = vpow.pop %v1998
        %v2000 = vmul.f32 %v1993, 1.442695
        %v2001 = vpow.pop %v2000
        %v2002 = vadd.f32 %v1995, 1.0
        %v2003 = vadd.f32 %v1997, 1.0
        %v2004 = vadd.f32 %v1999, 1.0
        %v2005 = vadd.f32 %v2001, 1.0
        %v2006 = vrcp.pop %v2002
        %v2007 = vmul.f32 1.0, %v2006
        %v2008 = vrcp.pop %v2003
        %v2009 = vmul.f32 1.0, %v2008
        %v2010 = vrcp.pop %v2004
        %v2011 = vmul.f32 1.0, %v2010
        %v2012 = vrcp.pop %v2005
        %v2013 = vmul.f32 1.0, %v2012
        %v2014 = vmul.f32 %v1943, %v2007
        %v2015 = vmul.f32 %v1945, %v2009
        %v2016 = vmul.f32 %v1984, %v2011
        %v2017 = vmul.f32 %v1986, %v2013
        %v2018 = vmul.f32 %v2014, %v1669
        %v2019 = vmul.f32 %v2015, %v1671
        %v2020 = vmul.f32 %v2016, %v1710
        %v2021 = vmul.f32 %v2017, %v1712
        %v2022 = vpack.c.bf16 %v2018, %v2018
        %v2023 = vpack.c.bf16 %v2019, %v2019
        %v2024 = vpack.c.bf16 %v2020, %v2020
        %v2025 = vpack.c.bf16 %v2021, %v2021
        %v2026 = vld [vmem:[#allocation16] sm:$0xf]
        %v2027 = vld [vmem:[#allocation16 + $0x4] sm:$0xf]
        %v2028 = vld [vmem:[#allocation16 + $0x8] sm:$0xf]
        %v2029 = vld [vmem:[#allocation16 + $0xc] sm:$0xf]
        %v2030 = vld [vmem:[#allocation16 + $0x10] sm:$0xf]
        %v2031 = vld [vmem:[#allocation16 + $0x14] sm:$0xf]
        %v2032 = vld [vmem:[#allocation16 + $0x18] sm:$0xf]
        %v2033 = vld [vmem:[#allocation16 + $0x1c] sm:$0xf]
        %v2034 = vld [vmem:[#allocation16 + $0x20] sm:$0xf]
        %v2035 = vld [vmem:[#allocation16 + $0x24] sm:$0xf]
        %v2036 = vld [vmem:[#allocation16 + $0x28] sm:$0xf]
        %v2037 = vld [vmem:[#allocation16 + $0x2c] sm:$0xf]
        %v2038 = vld [vmem:[#allocation16 + $0x30] sm:$0xf]
        %v2039 = vld [vmem:[#allocation16 + $0x34] sm:$0xf]
        %v2040 = vld [vmem:[#allocation16 + $0x38] sm:$0xf]
        %v2041 = vld [vmem:[#allocation16 + $0x3c] sm:$0xf]
        %v2042 = vld [vmem:[#allocation16 + $0x40] sm:$0xf]
        %v2043 = vld [vmem:[#allocation16 + $0x44] sm:$0xf]
        %v2044 = vld [vmem:[#allocation16 + $0x48] sm:$0xf]
        %v2045 = vld [vmem:[#allocation16 + $0x4c] sm:$0xf]
        %v2046 = vld [vmem:[#allocation16 + $0x50] sm:$0xf]
        %v2047 = vld [vmem:[#allocation16 + $0x54] sm:$0xf]
        %v2048 = vld [vmem:[#allocation16 + $0x58] sm:$0xf]
        %v2049 = vld [vmem:[#allocation16 + $0x5c] sm:$0xf]
        %v2050 = vld [vmem:[#allocation16 + $0x60] sm:$0xf]
        %v2051 = vld [vmem:[#allocation16 + $0x64] sm:$0xf]
        %v2052 = vld [vmem:[#allocation16 + $0x68] sm:$0xf]
        %v2053 = vld [vmem:[#allocation16 + $0x6c] sm:$0xf]
        %v2054 = vld [vmem:[#allocation16 + $0x70] sm:$0xf]
        %v2055 = vld [vmem:[#allocation16 + $0x74] sm:$0xf]
        %v2056 = vld [vmem:[#allocation16 + $0x78] sm:$0xf]
        %v2057 = vld [vmem:[#allocation16 + $0x7c] sm:$0xf]
        %v2058 = vld [vmem:[#allocation16 + $0x80] sm:$0xf]
        %v2059 = vld [vmem:[#allocation16 + $0x84] sm:$0xf]
        %v2060 = vld [vmem:[#allocation16 + $0x88] sm:$0xf]
        %v2061 = vld [vmem:[#allocation16 + $0x8c] sm:$0xf]
        %v2062 = vld [vmem:[#allocation16 + $0x90] sm:$0xf]
        %v2063 = vld [vmem:[#allocation16 + $0x94] sm:$0xf]
        %v2064 = vld [vmem:[#allocation16 + $0x98] sm:$0xf]
        %v2065 = vld [vmem:[#allocation16 + $0x9c] sm:$0xf]
        %v2066 = vld [vmem:[#allocation16 + $0xa0] sm:$0xf]
        %v2067 = vld [vmem:[#allocation16 + $0xa4] sm:$0xf]
        %v2068 = vld [vmem:[#allocation16 + $0xa8] sm:$0xf]
        %v2069 = vld [vmem:[#allocation16 + $0xac] sm:$0xf]
        %v2070 = vld [vmem:[#allocation16 + $0xb0] sm:$0xf]
        %v2071 = vld [vmem:[#allocation16 + $0xb4] sm:$0xf]
        %v2072 = vld [vmem:[#allocation16 + $0xb8] sm:$0xf]
        %v2073 = vld [vmem:[#allocation16 + $0xbc] sm:$0xf]
        %v2074 = vld [vmem:[#allocation16 + $0xc0] sm:$0xf]
        %v2075 = vld [vmem:[#allocation16 + $0xc4] sm:$0xf]
        %v2076 = vld [vmem:[#allocation16 + $0xc8] sm:$0xf]
        %v2077 = vld [vmem:[#allocation16 + $0xcc] sm:$0xf]
        %v2078 = vld [vmem:[#allocation16 + $0xd0] sm:$0xf]
        %v2079 = vld [vmem:[#allocation16 + $0xd4] sm:$0xf]
        %v2080 = vld [vmem:[#allocation16 + $0xd8] sm:$0xf]
        %v2081 = vld [vmem:[#allocation16 + $0xdc] sm:$0xf]
        %v2082 = vld [vmem:[#allocation16 + $0xe0] sm:$0xf]
        %v2083 = vld [vmem:[#allocation16 + $0xe4] sm:$0xf]
        %v2084 = vld [vmem:[#allocation16 + $0xe8] sm:$0xf]
        %v2085 = vld [vmem:[#allocation16 + $0xec] sm:$0xf]
        %v2086 = vld [vmem:[#allocation16 + $0xf0] sm:$0xf]
        %v2087 = vld [vmem:[#allocation16 + $0xf4] sm:$0xf]
        %v2088 = vld [vmem:[#allocation16 + $0xf8] sm:$0xf]
        %v2089 = vld [vmem:[#allocation16 + $0xfc] sm:$0xf]
        %v2154 = vunpack.c.l.b16 %v2026
        %v2155 = vunpack.c.l.b16 %v2027
        %v2156 = vunpack.c.l.b16 %v2028
        %v2157 = vunpack.c.l.b16 %v2029
        %v2158 = vunpack.c.l.b16 %v2030
        %v2159 = vunpack.c.l.b16 %v2031
        %v2160 = vunpack.c.l.b16 %v2032
        %v2161 = vunpack.c.l.b16 %v2033
        %v2162 = vunpack.c.l.b16 %v2034
        %v2163 = vunpack.c.l.b16 %v2035
        %v2164 = vunpack.c.l.b16 %v2036
        %v2165 = vunpack.c.l.b16 %v2037
        %v2166 = vunpack.c.l.b16 %v2038
        %v2167 = vunpack.c.l.b16 %v2039
        %v2168 = vunpack.c.l.b16 %v2040
        %v2169 = vunpack.c.l.b16 %v2041
        %v2170 = vunpack.c.l.b16 %v2042
        %v2171 = vunpack.c.l.b16 %v2043
        %v2172 = vunpack.c.l.b16 %v2044
        %v2173 = vunpack.c.l.b16 %v2045
        %v2174 = vunpack.c.l.b16 %v2046
        %v2175 = vunpack.c.l.b16 %v2047
        %v2176 = vunpack.c.l.b16 %v2048
        %v2177 = vunpack.c.l.b16 %v2049
        %v2178 = vunpack.c.l.b16 %v2050
        %v2179 = vunpack.c.l.b16 %v2051
        %v2180 = vunpack.c.l.b16 %v2052
        %v2181 = vunpack.c.l.b16 %v2053
        %v2182 = vunpack.c.l.b16 %v2054
        %v2183 = vunpack.c.l.b16 %v2055
        %v2184 = vunpack.c.l.b16 %v2056
        %v2185 = vunpack.c.l.b16 %v2057
        %v2186 = vunpack.c.l.b16 %v2058
        %v2187 = vunpack.c.l.b16 %v2059
        %v2188 = vunpack.c.l.b16 %v2060
        %v2189 = vunpack.c.l.b16 %v2061
        %v2190 = vunpack.c.l.b16 %v2062
        %v2191 = vunpack.c.l.b16 %v2063
        %v2192 = vunpack.c.l.b16 %v2064
        %v2193 = vunpack.c.l.b16 %v2065
        %v2194 = vunpack.c.l.b16 %v2066
        %v2195 = vunpack.c.l.b16 %v2067
        %v2196 = vunpack.c.l.b16 %v2068
        %v2197 = vunpack.c.l.b16 %v2069
        %v2198 = vunpack.c.l.b16 %v2070
        %v2199 = vunpack.c.l.b16 %v2071
        %v2200 = vunpack.c.l.b16 %v2072
        %v2201 = vunpack.c.l.b16 %v2073
        %v2202 = vunpack.c.l.b16 %v2074
        %v2203 = vunpack.c.l.b16 %v2075
        %v2204 = vunpack.c.l.b16 %v2076
        %v2205 = vunpack.c.l.b16 %v2077
        %v2206 = vunpack.c.l.b16 %v2078
        %v2207 = vunpack.c.l.b16 %v2079
        %v2208 = vunpack.c.l.b16 %v2080
        %v2209 = vunpack.c.l.b16 %v2081
        %v2210 = vunpack.c.l.b16 %v2082
        %v2211 = vunpack.c.l.b16 %v2083
        %v2212 = vunpack.c.l.b16 %v2084
        %v2213 = vunpack.c.l.b16 %v2085
        %v2214 = vunpack.c.l.b16 %v2086
        %v2215 = vunpack.c.l.b16 %v2087
        %v2216 = vunpack.c.l.b16 %v2088
        %v2217 = vunpack.c.l.b16 %v2089
        %v2218 = vpack.c.b16 %v2155, %v2154
        %v2219 = vpack.c.b16 %v2157, %v2156
        %v2220 = vpack.c.b16 %v2159, %v2158
        %v2221 = vpack.c.b16 %v2161, %v2160
        %v2222 = vpack.c.b16 %v2163, %v2162
        %v2223 = vpack.c.b16 %v2165, %v2164
        %v2224 = vpack.c.b16 %v2167, %v2166
        %v2225 = vpack.c.b16 %v2169, %v2168
        %v2226 = vpack.c.b16 %v2171, %v2170
        %v2227 = vpack.c.b16 %v2173, %v2172
        %v2228 = vpack.c.b16 %v2175, %v2174
        %v2229 = vpack.c.b16 %v2177, %v2176
        %v2230 = vpack.c.b16 %v2179, %v2178
        %v2231 = vpack.c.b16 %v2181, %v2180
        %v2232 = vpack.c.b16 %v2183, %v2182
        %v2233 = vpack.c.b16 %v2185, %v2184
        %v2234 = vpack.c.b16 %v2187, %v2186
        %v2235 = vpack.c.b16 %v2189, %v2188
        %v2236 = vpack.c.b16 %v2191, %v2190
        %v2237 = vpack.c.b16 %v2193, %v2192
        %v2238 = vpack.c.b16 %v2195, %v2194
        %v2239 = vpack.c.b16 %v2197, %v2196
        %v2240 = vpack.c.b16 %v2199, %v2198
        %v2241 = vpack.c.b16 %v2201, %v2200
        %v2242 = vpack.c.b16 %v2203, %v2202
        %v2243 = vpack.c.b16 %v2205, %v2204
        %v2244 = vpack.c.b16 %v2207, %v2206
        %v2245 = vpack.c.b16 %v2209, %v2208
        %v2246 = vpack.c.b16 %v2211, %v2210
        %v2247 = vpack.c.b16 %v2213, %v2212
        %v2248 = vpack.c.b16 %v2215, %v2214
        %v2249 = vpack.c.b16 %v2217, %v2216
        %2282 = vmatprep.subr.bf16.mxu0 0
        %2283 = vmatpush1.bf16.msra.mxu0 %v2218
        %2284 = vmatprep.subr.bf16.mxu0 0
        %2285 = vmatpush1.bf16.msra.mxu0 %v2219
        %2286 = vmatprep.subr.bf16.mxu0 0
        %2287 = vmatpush1.bf16.msra.mxu0 %v2220
        %2288 = vmatprep.subr.bf16.mxu0 0
        %2289 = vmatpush1.bf16.msra.mxu0 %v2221
        %2290 = vmatprep.subr.bf16.mxu0 0
        %2291 = vmatpush1.bf16.msra.mxu0 %v2222
        %2292 = vmatprep.subr.bf16.mxu0 0
        %2293 = vmatpush1.bf16.msra.mxu0 %v2223
        %2294 = vmatprep.subr.bf16.mxu0 0
        %2295 = vmatpush1.bf16.msra.mxu0 %v2224
        %2296 = vmatprep.subr.bf16.mxu0 0
        %2297 = vmatpush1.bf16.msra.mxu0 %v2225
        %2298 = vmatprep.subr.bf16.mxu0 0
        %2299 = vmatpush1.bf16.msra.mxu0 %v2226
        %2300 = vmatprep.subr.bf16.mxu0 0
        %2301 = vmatpush1.bf16.msra.mxu0 %v2227
        %2302 = vmatprep.subr.bf16.mxu0 0
        %2303 = vmatpush1.bf16.msra.mxu0 %v2228
        %2304 = vmatprep.subr.bf16.mxu0 0
        %2305 = vmatpush1.bf16.msra.mxu0 %v2229
        %2306 = vmatprep.subr.bf16.mxu0 0
        %2307 = vmatpush1.bf16.msra.mxu0 %v2230
        %2308 = vmatprep.subr.bf16.mxu0 0
        %2309 = vmatpush1.bf16.msra.mxu0 %v2231
        %2310 = vmatprep.subr.bf16.mxu0 0
        %2311 = vmatpush1.bf16.msra.mxu0 %v2232
        %2312 = vmatprep.subr.bf16.mxu0 0
        %2313 = vmatpush1.bf16.msra.mxu0 %v2233
        %2314 = vmatprep.mubr.bf16.mxu0 %v2023
        %2315 = vmatmul.mubr.bf16.gmra.mrb[0].mxu0 %v2022
        %v2316 = vpop.f32.mrb[0].mxu0
        %v2317 = vadd.f32 0.0, %v2316
        %v2318 = vpop.f32.mrb[0].mxu0
        %v2319 = vpop.f32.mrb[0].mxu0
        %v2320 = vpop.f32.mrb[0].mxu0
        %2321 = vdwg.mxu0
        %2322 = vmatprep.subr.bf16.mxu0 0
        %2323 = vmatpush1.bf16.msra.mxu0 %v2234
        %2324 = vmatprep.subr.bf16.mxu0 0
        %2325 = vmatpush1.bf16.msra.mxu0 %v2235
        %2326 = vmatprep.subr.bf16.mxu0 0
        %2327 = vmatpush1.bf16.msra.mxu0 %v2236
        %2328 = vmatprep.subr.bf16.mxu0 0
        %2329 = vmatpush1.bf16.msra.mxu0 %v2237
        %2330 = vmatprep.subr.bf16.mxu0 0
        %2331 = vmatpush1.bf16.msra.mxu0 %v2238
        %2332 = vmatprep.subr.bf16.mxu0 0
        %2333 = vmatpush1.bf16.msra.mxu0 %v2239
        %2334 = vmatprep.subr.bf16.mxu0 0
        %2335 = vmatpush1.bf16.msra.mxu0 %v2240
        %2336 = vmatprep.subr.bf16.mxu0 0
        %2337 = vmatpush1.bf16.msra.mxu0 %v2241
        %2338 = vmatprep.subr.bf16.mxu0 0
        %2339 = vmatpush1.bf16.msra.mxu0 %v2242
        %2340 = vmatprep.subr.bf16.mxu0 0
        %2341 = vmatpush1.bf16.msra.mxu0 %v2243
        %2342 = vmatprep.subr.bf16.mxu0 0
        %2343 = vmatpush1.bf16.msra.mxu0 %v2244
        %2344 = vmatprep.subr.bf16.mxu0 0
        %2345 = vmatpush1.bf16.msra.mxu0 %v2245
        %2346 = vmatprep.subr.bf16.mxu0 0
        %2347 = vmatpush1.bf16.msra.mxu0 %v2246
        %2348 = vmatprep.subr.bf16.mxu0 0
        %2349 = vmatpush1.bf16.msra.mxu0 %v2247
        %2350 = vmatprep.subr.bf16.mxu0 0
        %2351 = vmatpush1.bf16.msra.mxu0 %v2248
        %2352 = vmatprep.subr.bf16.mxu0 0
        %2353 = vmatpush1.bf16.msra.mxu0 %v2249
        %2354 = vmatprep.mubr.bf16.mxu0 %v2025
        %2355 = vmatmul.mubr.bf16.gmra.mrb[0].mxu0 %v2024
        %v2356 = vpop.f32.mrb[0].mxu0
        %v2357 = vadd.f32 %v2317, %v2356
        %v2358 = vpop.f32.mrb[0].mxu0
        %v2359 = vpop.f32.mrb[0].mxu0
        %v2360 = vpop.f32.mrb[0].mxu0
        %2361 = vdwg.mxu0
        %v2362 = vadd.f32 %v1441, %v2357
        %2363 = vst [vmem:[%s560] sm:$0xff] %v2362
        %s2364 = sand.u32 %s299, 1
        %s2365 = scalar_lea.sflag [#allocation4], %s2364
        %s2366 = sand.u32 %s299, 1
        %s2367 = smul.addr %s2366, 8
        %s2368 = scalar_lea.vmem [#allocation17], %s2367
        // Predicated region
        $region101: #{tpu_custom_call.1} parent=63 // pred_check
          %p2369 = pneg %p309
        $region102: #{tpu_custom_call.1} parent=63 // pred_check_branch
          %2371 = sbr.rel (%p2369) target = $region104
        $region103: #{tpu_custom_call.1} parent=63 // pred_region
          %s2373 = ssub.s32 128, 128
          %2374 = vsyncadd %s2365, %s2373
          %s2375 = smul.addr %s38, 2
          %s2376 = sadd.s32 %s39, %s2375
          %s2377 = smul.addr %s2376, 128
          %s2378 = scalar_lea.hbm %s11, %s2377
          %s2380 = sshll.u32 %s2368, 4
          %s2381 = int_to_ptr.vmem [resolvable:$true] %s2380
          %2383 = dma.vmem_to_hbm [thread:$0]  %s2381, 128, %s2378, %s2365
        $region104: #{tpu_custom_call.1} parent=63 // pred_fallthru
          _
      $region64: #{tpu_custom_call.1} parent=5 // pred_fallthru
        _
      %p2384 = scmp.le.s32.totalorder 2, %s29
      // Predicated region
      $region105: #{tpu_custom_call.1} parent=5 // pred_check
        %p2385 = pneg %p2384
      $region106: #{tpu_custom_call.1} parent=5 // pred_check_branch
        %2387 = sbr.rel (%p2385) target = $region108
      $region107: #{tpu_custom_call.1} parent=5 // pred_region
        %s2388 = ssub.s32 %s29, 2
        // Predicated region
        $region109: #{tpu_custom_call.1} parent=107 // pred_check
          %p2389 = pneg %p315
        $region110: #{tpu_custom_call.1} parent=107 // pred_check_branch
          %2391 = sbr.rel (%p2389) target = $region112
        $region111: #{tpu_custom_call.1} parent=107 // pred_region
          %s2392 = sand.u32 %s300, 1
          %s2393 = scalar_lea.sflag [#allocation4], %s2392
          %s2394 = sand.u32 %s300, 1
          %s2395 = smul.addr %s2394, 8
          %s2396 = scalar_lea.vmem [#allocation17], %s2395
          %2397 = dma.done %s2393, 128
        $region112: #{tpu_custom_call.1} parent=107 // pred_fallthru
          _
      $region108: #{tpu_custom_call.1} parent=5 // pred_fallthru
        _
    $region6: #{tpu_custom_call.1} parent=1 // loop_footer
      %s33 = sadd.s32 1, %s29
    $region7: #{tpu_custom_call.1} parent=1 // loop_footer_branch
      %28 = sbr.rel target = $region3
    $region8: #{tpu_custom_call.1} parent=1 // loop_exit
      _
    %2398 = vsyncpa [#allocation3], 1
    %s2399 = scalar_lea.sflag [#allocation3], 1
    %2400 = vsyncpa %s2399, 1
    %2401 = vsyncpa [#allocation6], 1
    %s2402 = scalar_lea.sflag [#allocation6], 1
    %2403 = vsyncpa %s2402, 1
    %2404 = vsyncpa [#allocation9], 1
    %2405 = vsyncpa [#allocation12], 1
    %2406 = vsyncpa [#allocation15], 1
    %2407 = vsyncpa [#allocation4], 1
    %s2408 = scalar_lea.sflag [#allocation4], 1
    %2409 = vsyncpa %s2408, 1

</llo_original>
